<compile_context>
chip_gen: v6e
topology: v6e:2x2x1
jax: 0.10.0
libtpu: 0.0.40
codegen_flags: <defaults>
</compile_context>

<pallas_src>
import functools

import jax
import jax.numpy as jnp
from jax import lax
from jax.experimental import pallas as pl
from jax.experimental.pallas import tpu as pltpu  # noqa: F401  (kept for TPU-specific tuning hooks)


# ----------------------------- Pallas kernel ------------------------------ #

def pos_tagger_kernel(emb_ref,                 # (L*B, E)  time-major flattened embeddings
                      wih_ref,                 # (E, 8H)   [W_ih_f^T | W_ih_b^T]
                      whh_ref,                 # (H, 8H)   [W_hh_f^T | W_hh_b^T]
                      b_ref,                   # (1, 8H)   combined biases (fwd | bwd)
                      wpred_ref,               # (2H, T)
                      bpred_ref,               # (1, T)
                      out_ref,                 # (L*B, T)  log-probs
                      *, L, B, H):
    G = 4 * H

    # Hoisted input projection for both directions in one MXU pass.
    #   gates_x[t*B+b, 0:4H]  = x_t[b] @ W_ih_f^T + (b_ih_f + b_hh_f)
    #   gates_x[t*B+b, 4H:8H] = x_t[b] @ W_ih_b^T + (b_ih_b + b_hh_b)
    gates_x = (jnp.dot(emb_ref[...], wih_ref[...],
                       preferred_element_type=jnp.float32)
               + b_ref[...])                                   # (L*B, 8H)

    whh = whh_ref[...]                                         # (H, 8H)

    # Row-stacked states: rows [:B] = forward dir, rows [B:] = backward dir.
    h = jnp.zeros((2 * B, H), jnp.float32)
    c = jnp.zeros((2 * B, H), jnp.float32)

    fwd_hs = [None] * L
    bwd_hs = [None] * L

    # Fully unrolled fused recurrence: one MXU push + two EUP gate passes per
    # step for both directions together.
    for s in range(L):
        t_f = s
        t_b = L - 1 - s

        gh = jnp.dot(h, whh, preferred_element_type=jnp.float32)   # (2B, 8H)
        gx_f = gates_x[t_f * B:(t_f + 1) * B, 0:G]                  # (B, 4H)
        gx_b = gates_x[t_b * B:(t_b + 1) * B, G:2 * G]              # (B, 4H)
        gates = jnp.concatenate(
            [gx_f + gh[:B, 0:G], gx_b + gh[B:, G:2 * G]], axis=0)   # (2B, 4H)

        sig = jax.nn.sigmoid(gates)        # one EUP pass over the whole vreg
        th = jnp.tanh(gates)               # one EUP pass over the whole vreg
        i_g = sig[:, 0 * H:1 * H]
        f_g = sig[:, 1 * H:2 * H]
        g_g = th[:, 2 * H:3 * H]
        o_g = sig[:, 3 * H:4 * H]

        c = f_g * c + i_g * g_g
        h = o_g * jnp.tanh(c)

        fwd_hs[t_f] = h[:B]
        bwd_hs[t_b] = h[B:]

    # Hidden history stays in vregs; single (L*B, 2H) x (2H, T) projection.
    hid = jnp.concatenate(
        [jnp.concatenate(fwd_hs, axis=0),                      # (L*B, H)
         jnp.concatenate(bwd_hs, axis=0)],                     # (L*B, H)
        axis=1)                                                # (L*B, 2H)
    logits = (jnp.dot(hid, wpred_ref[...],
                      preferred_element_type=jnp.float32)
              + bpred_ref[...])                                # (L*B, T)

    # log_softmax over the tag dim.
    m = jnp.max(logits, axis=-1, keepdims=True)
    shifted = logits - m
    lse = jnp.log(jnp.sum(jnp.exp(shifted), axis=-1, keepdims=True))
    out_ref[...] = shifted - lse


# ------------------------------- wrapper ----------------------------------- #

def pos_tagger_forward(batch, params):
    """batch: int32 (B, L). Returns log-probs of shape (B, tagset, L)."""
    emb_table = params["emb"]                         # (V, E)
    B, L = batch.shape
    E = emb_table.shape[1]
    H = params["whh_f"].shape[1]                      # W_hh is (4H, H)
    T = params["wpred"].shape[0]                      # W_pred is (T, 2H)

    # glue: embedding gather + time-major flattened layout (row = t*B + b)
    embeds = jnp.take(emb_table, batch, axis=0)       # (B, L, E)
    emb_flat = jnp.transpose(embeds, (1, 0, 2)).reshape(L * B, E)

    # kernel-side weight layouts: both directions concatenated along N
    wih_cat = jnp.concatenate([params["wih_f"].T, params["wih_b"].T], axis=1)  # (E, 8H)
    whh_cat = jnp.concatenate([params["whh_f"].T, params["whh_b"].T], axis=1)  # (H, 8H)
    b_cat = jnp.concatenate([params["bih_f"] + params["bhh_f"],
                             params["bih_b"] + params["bhh_b"]]).reshape(1, 8 * H)
    wpred_t = params["wpred"].T                       # (2H, T)
    bpred = params["bpred"].reshape(1, T)

    kernel = functools.partial(pos_tagger_kernel, L=L, B=B, H=H)

    out_flat = pl.pallas_call(
        kernel,
        out_shape=jax.ShapeDtypeStruct((L * B, T), jnp.float32),
        grid=(1,),
        in_specs=[
            pl.BlockSpec((L * B, E), lambda i: (0, 0)),
            pl.BlockSpec((E, 8 * H), lambda i: (0, 0)),
            pl.BlockSpec((H, 8 * H), lambda i: (0, 0)),
            pl.BlockSpec((1, 8 * H), lambda i: (0, 0)),
            pl.BlockSpec((2 * H, T), lambda i: (0, 0)),
            pl.BlockSpec((1, T), lambda i: (0, 0)),
        ],
        out_specs=pl.BlockSpec((L * B, T), lambda i: (0, 0)),
    )(emb_flat, wih_cat, whh_cat, b_cat, wpred_t, bpred)

    out_lbt = out_flat.reshape(L, B, T)               # (L, B, T)
    return jnp.transpose(out_lbt, (1, 2, 0))          # (B, T, L)


# --------------------------- pure-JAX reference ----------------------------- #

def _ref_lstm_dir(x_ble, wih, whh, bih, bhh, reverse):
    B, L, _E = x_ble.shape
    H = whh.shape[1]

    def cell(carry, x_t):
        h, c = carry
        gates = x_t @ wih.T + h @ whh.T + bih + bhh
        i = jax.nn.sigmoid(gates[:, :H])
        f = jax.nn.sigmoid(gates[:, H:2 * H])
        g = jnp.tanh(gates[:, 2 * H:3 * H])
        o = jax.nn.sigmoid(gates[:, 3 * H:])
        c = f * c + i * g
        h = o * jnp.tanh(c)
        return (h, c), h

    xs = jnp.transpose(x_ble, (1, 0, 2))
    if reverse:
        xs = xs[::-1]
    _, hs = lax.scan(cell, (jnp.zeros((B, H)), jnp.zeros((B, H))), xs)
    if reverse:
        hs = hs[::-1]
    return jnp.transpose(hs, (1, 0, 2))               # (B, L, H)


def reference_forward(batch, p):
    embeds = jnp.take(p["emb"], batch, axis=0)
    hf = _ref_lstm_dir(embeds, p["wih_f"], p["whh_f"], p["bih_f"], p["bhh_f"], False)
    hb = _ref_lstm_dir(embeds, p["wih_b"], p["whh_b"], p["bih_b"], p["bhh_b"], True)
    rnn = jnp.concatenate([hf, hb], axis=-1)          # (B, L, 2H)
    logits = rnn @ p["wpred"].T + p["bpred"]          # (B, L, T)
    logp = jax.nn.log_softmax(logits, axis=2)
    return jnp.transpose(logp, (0, 2, 1))             # (B, T, L)


# ---------------------------------- main ------------------------------------ #

if __name__ == "__main__":
    B, L = 2, 8                 # batch, seq
    V, E = 64, 32               # vocab_size, embedding_dim
    H, T = 32, 16               # hidden_dim, tagset_size (bidirectional)

    key = jax.random.PRNGKey(0)
    ks = jax.random.split(key, 13)
    s = 1.0 / jnp.sqrt(jnp.float32(H))

    params = {
        "emb":    jax.random.normal(ks[0], (V, E), jnp.float32) * 0.1,
        "wih_f":  jax.random.uniform(ks[1], (4 * H, E), jnp.float32, -s, s),
        "whh_f":  jax.random.uniform(ks[2], (4 * H, H), jnp.float32, -s, s),
        "bih_f":  jax.random.uniform(ks[3], (4 * H,), jnp.float32, -s, s),
        "bhh_f":  jax.random.uniform(ks[4], (4 * H,), jnp.float32, -s, s),
        "wih_b":  jax.random.uniform(ks[5], (4 * H, E), jnp.float32, -s, s),
        "whh_b":  jax.random.uniform(ks[6], (4 * H, H), jnp.float32, -s, s),
        "bih_b":  jax.random.uniform(ks[7], (4 * H,), jnp.float32, -s, s),
        "bhh_b":  jax.random.uniform(ks[8], (4 * H,), jnp.float32, -s, s),
        "wpred":  jax.random.uniform(ks[9], (T, 2 * H), jnp.float32, -s, s),
        "bpred":  jax.random.uniform(ks[10], (T,), jnp.float32, -s, s),
    }
    batch = jax.random.randint(ks[11], (B, L), 0, V, dtype=jnp.int32)

    out = jax.block_until_ready(pos_tagger_forward(batch, params))
    ref = jax.block_until_ready(reference_forward(batch, params))

    assert out.shape == (B, T, L), out.shape
    max_err = float(jnp.max(jnp.abs(out - ref)))
    assert max_err < 1e-2, f"max abs error {max_err}"
    print("KERNEL_OK")
</pallas_src>

<mosaic_0001>
module attributes {stable_mosaic.version = 11 : i64} {
  func.func @pos_tagger_kernel(%arg0: i32, %arg1: memref<16x32xf32, #tpu.memory_space<vmem>>, %arg2: memref<32x256xf32, #tpu.memory_space<vmem>>, %arg3: memref<32x256xf32, #tpu.memory_space<vmem>>, %arg4: memref<1x256xf32, #tpu.memory_space<vmem>>, %arg5: memref<64x16xf32, #tpu.memory_space<vmem>>, %arg6: memref<1x16xf32, #tpu.memory_space<vmem>>, %arg7: memref<16x16xf32, #tpu.memory_space<vmem>>) attributes {dimension_semantics = [#tpu.dimension_semantics<arbitrary>], iteration_bounds = array<i64: 1>, scalar_prefetch = 0 : i64, scratch_operands = 0 : i64, tpu.core_type = #tpu.core_type<tc>, window_params = [{pipeline_mode = #tpu.pipeline_mode<synchronous>, transform_indices = @transform_0, window_bounds = array<i64: 16, 32>}, {pipeline_mode = #tpu.pipeline_mode<synchronous>, transform_indices = @transform_1, window_bounds = array<i64: 32, 256>}, {pipeline_mode = #tpu.pipeline_mode<synchronous>, transform_indices = @transform_2, window_bounds = array<i64: 32, 256>}, {pipeline_mode = #tpu.pipeline_mode<synchronous>, transform_indices = @transform_3, window_bounds = array<i64: 1, 256>}, {pipeline_mode = #tpu.pipeline_mode<synchronous>, transform_indices = @transform_4, window_bounds = array<i64: 64, 16>}, {pipeline_mode = #tpu.pipeline_mode<synchronous>, transform_indices = @transform_5, window_bounds = array<i64: 1, 16>}, {pipeline_mode = #tpu.pipeline_mode<synchronous>, transform_indices = @transform_6, window_bounds = array<i64: 16, 16>}]} {
    %c0 = arith.constant 0 : index
    %c0_0 = arith.constant 0 : index
    %0 = vector.load %arg1[%c0, %c0_0] : memref<16x32xf32, #tpu.memory_space<vmem>>, vector<16x32xf32>
    %c0_1 = arith.constant 0 : index
    %c0_2 = arith.constant 0 : index
    %1 = vector.load %arg2[%c0_1, %c0_2] : memref<32x256xf32, #tpu.memory_space<vmem>>, vector<32x256xf32>
    %cst = arith.constant dense<0.000000e+00> : vector<16x256xf32>
    %2 = tpu.matmul %0, %1, %cst {dimension_numbers = #tpu.dot_dimension_numbers<[1], [0], [0], [1], [0, 0, 1, 1], [], []>} : vector<16x32xf32>, vector<32x256xf32>, vector<16x256xf32> -> vector<16x256xf32>
    %c0_3 = arith.constant 0 : index
    %c0_4 = arith.constant 0 : index
    %3 = vector.load %arg4[%c0_3, %c0_4] : memref<1x256xf32, #tpu.memory_space<vmem>>, vector<1x256xf32>
    %4 = vector.broadcast %3 : vector<1x256xf32> to vector<16x256xf32>
    %5 = arith.addf %2, %4 : vector<16x256xf32>
    %c0_5 = arith.constant 0 : index
    %c0_6 = arith.constant 0 : index
    %6 = vector.load %arg3[%c0_5, %c0_6] : memref<32x256xf32, #tpu.memory_space<vmem>>, vector<32x256xf32>
    %cst_7 = arith.constant 0.000000e+00 : f32
    %7 = vector.broadcast %cst_7 : f32 to vector<4x32xf32>
    %cst_8 = arith.constant 0.000000e+00 : f32
    %8 = vector.broadcast %cst_8 : f32 to vector<4x32xf32>
    %cst_9 = arith.constant dense<0.000000e+00> : vector<4x256xf32>
    %9 = tpu.matmul %7, %6, %cst_9 {dimension_numbers = #tpu.dot_dimension_numbers<[1], [0], [0], [1], [0, 0, 1, 1], [], []>} : vector<4x32xf32>, vector<32x256xf32>, vector<4x256xf32> -> vector<4x256xf32>
    %10 = vector.extract_strided_slice %5 {offsets = [0, 0], sizes = [2, 128], strides = [1, 1]} : vector<16x256xf32> to vector<2x128xf32>
    %11 = vector.extract_strided_slice %5 {offsets = [14, 128], sizes = [2, 128], strides = [1, 1]} : vector<16x256xf32> to vector<2x128xf32>
    %12 = vector.extract_strided_slice %9 {offsets = [0, 0], sizes = [2, 128], strides = [1, 1]} : vector<4x256xf32> to vector<2x128xf32>
    %13 = arith.addf %10, %12 : vector<2x128xf32>
    %14 = vector.extract_strided_slice %9 {offsets = [2, 128], sizes = [2, 128], strides = [1, 1]} : vector<4x256xf32> to vector<2x128xf32>
    %15 = arith.addf %11, %14 : vector<2x128xf32>
    %16 = tpu.concatenate %13, %15 in 0 : vector<2x128xf32>, vector<2x128xf32> -> vector<4x128xf32>
    %17 = arith.negf %16 : vector<4x128xf32>
    %18 = math.exp %17 : vector<4x128xf32>
    %cst_10 = arith.constant 1.000000e+00 : f32
    %19 = vector.broadcast %cst_10 : f32 to vector<4x128xf32>
    %20 = arith.addf %19, %18 : vector<4x128xf32>
    %21 = arith.divf %19, %20 : vector<4x128xf32>
    %22 = math.tanh %16 : vector<4x128xf32>
    %23 = vector.extract_strided_slice %21 {offsets = [0, 0], sizes = [4, 32], strides = [1, 1]} : vector<4x128xf32> to vector<4x32xf32>
    %24 = vector.extract_strided_slice %21 {offsets = [0, 32], sizes = [4, 32], strides = [1, 1]} : vector<4x128xf32> to vector<4x32xf32>
    %25 = vector.extract_strided_slice %22 {offsets = [0, 64], sizes = [4, 32], strides = [1, 1]} : vector<4x128xf32> to vector<4x32xf32>
    %26 = vector.extract_strided_slice %21 {offsets = [0, 96], sizes = [4, 32], strides = [1, 1]} : vector<4x128xf32> to vector<4x32xf32>
    %27 = arith.mulf %24, %8 : vector<4x32xf32>
    %28 = arith.mulf %23, %25 : vector<4x32xf32>
    %29 = arith.addf %27, %28 : vector<4x32xf32>
    %30 = math.tanh %29 : vector<4x32xf32>
    %31 = arith.mulf %26, %30 : vector<4x32xf32>
    %32 = vector.extract_strided_slice %31 {offsets = [0, 0], sizes = [2, 32], strides = [1, 1]} : vector<4x32xf32> to vector<2x32xf32>
    %33 = vector.extract_strided_slice %31 {offsets = [2, 0], sizes = [2, 32], strides = [1, 1]} : vector<4x32xf32> to vector<2x32xf32>
    %cst_11 = arith.constant dense<0.000000e+00> : vector<4x256xf32>
    %34 = tpu.matmul %31, %6, %cst_11 {dimension_numbers = #tpu.dot_dimension_numbers<[1], [0], [0], [1], [0, 0, 1, 1], [], []>} : vector<4x32xf32>, vector<32x256xf32>, vector<4x256xf32> -> vector<4x256xf32>
    %35 = vector.extract_strided_slice %5 {offsets = [2, 0], sizes = [2, 128], strides = [1, 1]} : vector<16x256xf32> to vector<2x128xf32>
    %36 = vector.extract_strided_slice %5 {offsets = [12, 128], sizes = [2, 128], strides = [1, 1]} : vector<16x256xf32> to vector<2x128xf32>
    %37 = vector.extract_strided_slice %34 {offsets = [0, 0], sizes = [2, 128], strides = [1, 1]} : vector<4x256xf32> to vector<2x128xf32>
    %38 = arith.addf %35, %37 : vector<2x128xf32>
    %39 = vector.extract_strided_slice %34 {offsets = [2, 128], sizes = [2, 128], strides = [1, 1]} : vector<4x256xf32> to vector<2x128xf32>
    %40 = arith.addf %36, %39 : vector<2x128xf32>
    %41 = tpu.concatenate %38, %40 in 0 : vector<2x128xf32>, vector<2x128xf32> -> vector<4x128xf32>
    %42 = arith.negf %41 : vector<4x128xf32>
    %43 = math.exp %42 : vector<4x128xf32>
    %cst_12 = arith.constant 1.000000e+00 : f32
    %44 = vector.broadcast %cst_12 : f32 to vector<4x128xf32>
    %45 = arith.addf %44, %43 : vector<4x128xf32>
    %46 = arith.divf %44, %45 : vector<4x128xf32>
    %47 = math.tanh %41 : vector<4x128xf32>
    %48 = vector.extract_strided_slice %46 {offsets = [0, 0], sizes = [4, 32], strides = [1, 1]} : vector<4x128xf32> to vector<4x32xf32>
    %49 = vector.extract_strided_slice %46 {offsets = [0, 32], sizes = [4, 32], strides = [1, 1]} : vector<4x128xf32> to vector<4x32xf32>
    %50 = vector.extract_strided_slice %47 {offsets = [0, 64], sizes = [4, 32], strides = [1, 1]} : vector<4x128xf32> to vector<4x32xf32>
    %51 = vector.extract_strided_slice %46 {offsets = [0, 96], sizes = [4, 32], strides = [1, 1]} : vector<4x128xf32> to vector<4x32xf32>
    %52 = arith.mulf %49, %29 : vector<4x32xf32>
    %53 = arith.mulf %48, %50 : vector<4x32xf32>
    %54 = arith.addf %52, %53 : vector<4x32xf32>
    %55 = math.tanh %54 : vector<4x32xf32>
    %56 = arith.mulf %51, %55 : vector<4x32xf32>
    %57 = vector.extract_strided_slice %56 {offsets = [0, 0], sizes = [2, 32], strides = [1, 1]} : vector<4x32xf32> to vector<2x32xf32>
    %58 = vector.extract_strided_slice %56 {offsets = [2, 0], sizes = [2, 32], strides = [1, 1]} : vector<4x32xf32> to vector<2x32xf32>
    %cst_13 = arith.constant dense<0.000000e+00> : vector<4x256xf32>
    %59 = tpu.matmul %56, %6, %cst_13 {dimension_numbers = #tpu.dot_dimension_numbers<[1], [0], [0], [1], [0, 0, 1, 1], [], []>} : vector<4x32xf32>, vector<32x256xf32>, vector<4x256xf32> -> vector<4x256xf32>
    %60 = vector.extract_strided_slice %5 {offsets = [4, 0], sizes = [2, 128], strides = [1, 1]} : vector<16x256xf32> to vector<2x128xf32>
    %61 = vector.extract_strided_slice %5 {offsets = [10, 128], sizes = [2, 128], strides = [1, 1]} : vector<16x256xf32> to vector<2x128xf32>
    %62 = vector.extract_strided_slice %59 {offsets = [0, 0], sizes = [2, 128], strides = [1, 1]} : vector<4x256xf32> to vector<2x128xf32>
    %63 = arith.addf %60, %62 : vector<2x128xf32>
    %64 = vector.extract_strided_slice %59 {offsets = [2, 128], sizes = [2, 128], strides = [1, 1]} : vector<4x256xf32> to vector<2x128xf32>
    %65 = arith.addf %61, %64 : vector<2x128xf32>
    %66 = tpu.concatenate %63, %65 in 0 : vector<2x128xf32>, vector<2x128xf32> -> vector<4x128xf32>
    %67 = arith.negf %66 : vector<4x128xf32>
    %68 = math.exp %67 : vector<4x128xf32>
    %cst_14 = arith.constant 1.000000e+00 : f32
    %69 = vector.broadcast %cst_14 : f32 to vector<4x128xf32>
    %70 = arith.addf %69, %68 : vector<4x128xf32>
    %71 = arith.divf %69, %70 : vector<4x128xf32>
    %72 = math.tanh %66 : vector<4x128xf32>
    %73 = vector.extract_strided_slice %71 {offsets = [0, 0], sizes = [4, 32], strides = [1, 1]} : vector<4x128xf32> to vector<4x32xf32>
    %74 = vector.extract_strided_slice %71 {offsets = [0, 32], sizes = [4, 32], strides = [1, 1]} : vector<4x128xf32> to vector<4x32xf32>
    %75 = vector.extract_strided_slice %72 {offsets = [0, 64], sizes = [4, 32], strides = [1, 1]} : vector<4x128xf32> to vector<4x32xf32>
    %76 = vector.extract_strided_slice %71 {offsets = [0, 96], sizes = [4, 32], strides = [1, 1]} : vector<4x128xf32> to vector<4x32xf32>
    %77 = arith.mulf %74, %54 : vector<4x32xf32>
    %78 = arith.mulf %73, %75 : vector<4x32xf32>
    %79 = arith.addf %77, %78 : vector<4x32xf32>
    %80 = math.tanh %79 : vector<4x32xf32>
    %81 = arith.mulf %76, %80 : vector<4x32xf32>
    %82 = vector.extract_strided_slice %81 {offsets = [0, 0], sizes = [2, 32], strides = [1, 1]} : vector<4x32xf32> to vector<2x32xf32>
    %83 = vector.extract_strided_slice %81 {offsets = [2, 0], sizes = [2, 32], strides = [1, 1]} : vector<4x32xf32> to vector<2x32xf32>
    %cst_15 = arith.constant dense<0.000000e+00> : vector<4x256xf32>
    %84 = tpu.matmul %81, %6, %cst_15 {dimension_numbers = #tpu.dot_dimension_numbers<[1], [0], [0], [1], [0, 0, 1, 1], [], []>} : vector<4x32xf32>, vector<32x256xf32>, vector<4x256xf32> -> vector<4x256xf32>
    %85 = vector.extract_strided_slice %5 {offsets = [6, 0], sizes = [2, 128], strides = [1, 1]} : vector<16x256xf32> to vector<2x128xf32>
    %86 = vector.extract_strided_slice %5 {offsets = [8, 128], sizes = [2, 128], strides = [1, 1]} : vector<16x256xf32> to vector<2x128xf32>
    %87 = vector.extract_strided_slice %84 {offsets = [0, 0], sizes = [2, 128], strides = [1, 1]} : vector<4x256xf32> to vector<2x128xf32>
    %88 = arith.addf %85, %87 : vector<2x128xf32>
    %89 = vector.extract_strided_slice %84 {offsets = [2, 128], sizes = [2, 128], strides = [1, 1]} : vector<4x256xf32> to vector<2x128xf32>
    %90 = arith.addf %86, %89 : vector<2x128xf32>
    %91 = tpu.concatenate %88, %90 in 0 : vector<2x128xf32>, vector<2x128xf32> -> vector<4x128xf32>
    %92 = arith.negf %91 : vector<4x128xf32>
    %93 = math.exp %92 : vector<4x128xf32>
    %cst_16 = arith.constant 1.000000e+00 : f32
    %94 = vector.broadcast %cst_16 : f32 to vector<4x128xf32>
    %95 = arith.addf %94, %93 : vector<4x128xf32>
    %96 = arith.divf %94, %95 : vector<4x128xf32>
    %97 = math.tanh %91 : vector<4x128xf32>
    %98 = vector.extract_strided_slice %96 {offsets = [0, 0], sizes = [4, 32], strides = [1, 1]} : vector<4x128xf32> to vector<4x32xf32>
    %99 = vector.extract_strided_slice %96 {offsets = [0, 32], sizes = [4, 32], strides = [1, 1]} : vector<4x128xf32> to vector<4x32xf32>
    %100 = vector.extract_strided_slice %97 {offsets = [0, 64], sizes = [4, 32], strides = [1, 1]} : vector<4x128xf32> to vector<4x32xf32>
    %101 = vector.extract_strided_slice %96 {offsets = [0, 96], sizes = [4, 32], strides = [1, 1]} : vector<4x128xf32> to vector<4x32xf32>
    %102 = arith.mulf %99, %79 : vector<4x32xf32>
    %103 = arith.mulf %98, %100 : vector<4x32xf32>
    %104 = arith.addf %102, %103 : vector<4x32xf32>
    %105 = math.tanh %104 : vector<4x32xf32>
    %106 = arith.mulf %101, %105 : vector<4x32xf32>
    %107 = vector.extract_strided_slice %106 {offsets = [0, 0], sizes = [2, 32], strides = [1, 1]} : vector<4x32xf32> to vector<2x32xf32>
    %108 = vector.extract_strided_slice %106 {offsets = [2, 0], sizes = [2, 32], strides = [1, 1]} : vector<4x32xf32> to vector<2x32xf32>
    %cst_17 = arith.constant dense<0.000000e+00> : vector<4x256xf32>
    %109 = tpu.matmul %106, %6, %cst_17 {dimension_numbers = #tpu.dot_dimension_numbers<[1], [0], [0], [1], [0, 0, 1, 1], [], []>} : vector<4x32xf32>, vector<32x256xf32>, vector<4x256xf32> -> vector<4x256xf32>
    %110 = vector.extract_strided_slice %5 {offsets = [8, 0], sizes = [2, 128], strides = [1, 1]} : vector<16x256xf32> to vector<2x128xf32>
    %111 = vector.extract_strided_slice %5 {offsets = [6, 128], sizes = [2, 128], strides = [1, 1]} : vector<16x256xf32> to vector<2x128xf32>
    %112 = vector.extract_strided_slice %109 {offsets = [0, 0], sizes = [2, 128], strides = [1, 1]} : vector<4x256xf32> to vector<2x128xf32>
    %113 = arith.addf %110, %112 : vector<2x128xf32>
    %114 = vector.extract_strided_slice %109 {offsets = [2, 128], sizes = [2, 128], strides = [1, 1]} : vector<4x256xf32> to vector<2x128xf32>
    %115 = arith.addf %111, %114 : vector<2x128xf32>
    %116 = tpu.concatenate %113, %115 in 0 : vector<2x128xf32>, vector<2x128xf32> -> vector<4x128xf32>
    %117 = arith.negf %116 : vector<4x128xf32>
    %118 = math.exp %117 : vector<4x128xf32>
    %cst_18 = arith.constant 1.000000e+00 : f32
    %119 = vector.broadcast %cst_18 : f32 to vector<4x128xf32>
    %120 = arith.addf %119, %118 : vector<4x128xf32>
    %121 = arith.divf %119, %120 : vector<4x128xf32>
    %122 = math.tanh %116 : vector<4x128xf32>
    %123 = vector.extract_strided_slice %121 {offsets = [0, 0], sizes = [4, 32], strides = [1, 1]} : vector<4x128xf32> to vector<4x32xf32>
    %124 = vector.extract_strided_slice %121 {offsets = [0, 32], sizes = [4, 32], strides = [1, 1]} : vector<4x128xf32> to vector<4x32xf32>
    %125 = vector.extract_strided_slice %122 {offsets = [0, 64], sizes = [4, 32], strides = [1, 1]} : vector<4x128xf32> to vector<4x32xf32>
    %126 = vector.extract_strided_slice %121 {offsets = [0, 96], sizes = [4, 32], strides = [1, 1]} : vector<4x128xf32> to vector<4x32xf32>
    %127 = arith.mulf %124, %104 : vector<4x32xf32>
    %128 = arith.mulf %123, %125 : vector<4x32xf32>
    %129 = arith.addf %127, %128 : vector<4x32xf32>
    %130 = math.tanh %129 : vector<4x32xf32>
    %131 = arith.mulf %126, %130 : vector<4x32xf32>
    %132 = vector.extract_strided_slice %131 {offsets = [0, 0], sizes = [2, 32], strides = [1, 1]} : vector<4x32xf32> to vector<2x32xf32>
    %133 = vector.extract_strided_slice %131 {offsets = [2, 0], sizes = [2, 32], strides = [1, 1]} : vector<4x32xf32> to vector<2x32xf32>
    %cst_19 = arith.constant dense<0.000000e+00> : vector<4x256xf32>
    %134 = tpu.matmul %131, %6, %cst_19 {dimension_numbers = #tpu.dot_dimension_numbers<[1], [0], [0], [1], [0, 0, 1, 1], [], []>} : vector<4x32xf32>, vector<32x256xf32>, vector<4x256xf32> -> vector<4x256xf32>
    %135 = vector.extract_strided_slice %5 {offsets = [10, 0], sizes = [2, 128], strides = [1, 1]} : vector<16x256xf32> to vector<2x128xf32>
    %136 = vector.extract_strided_slice %5 {offsets = [4, 128], sizes = [2, 128], strides = [1, 1]} : vector<16x256xf32> to vector<2x128xf32>
    %137 = vector.extract_strided_slice %134 {offsets = [0, 0], sizes = [2, 128], strides = [1, 1]} : vector<4x256xf32> to vector<2x128xf32>
    %138 = arith.addf %135, %137 : vector<2x128xf32>
    %139 = vector.extract_strided_slice %134 {offsets = [2, 128], sizes = [2, 128], strides = [1, 1]} : vector<4x256xf32> to vector<2x128xf32>
    %140 = arith.addf %136, %139 : vector<2x128xf32>
    %141 = tpu.concatenate %138, %140 in 0 : vector<2x128xf32>, vector<2x128xf32> -> vector<4x128xf32>
    %142 = arith.negf %141 : vector<4x128xf32>
    %143 = math.exp %142 : vector<4x128xf32>
    %cst_20 = arith.constant 1.000000e+00 : f32
    %144 = vector.broadcast %cst_20 : f32 to vector<4x128xf32>
    %145 = arith.addf %144, %143 : vector<4x128xf32>
    %146 = arith.divf %144, %145 : vector<4x128xf32>
    %147 = math.tanh %141 : vector<4x128xf32>
    %148 = vector.extract_strided_slice %146 {offsets = [0, 0], sizes = [4, 32], strides = [1, 1]} : vector<4x128xf32> to vector<4x32xf32>
    %149 = vector.extract_strided_slice %146 {offsets = [0, 32], sizes = [4, 32], strides = [1, 1]} : vector<4x128xf32> to vector<4x32xf32>
    %150 = vector.extract_strided_slice %147 {offsets = [0, 64], sizes = [4, 32], strides = [1, 1]} : vector<4x128xf32> to vector<4x32xf32>
    %151 = vector.extract_strided_slice %146 {offsets = [0, 96], sizes = [4, 32], strides = [1, 1]} : vector<4x128xf32> to vector<4x32xf32>
    %152 = arith.mulf %149, %129 : vector<4x32xf32>
    %153 = arith.mulf %148, %150 : vector<4x32xf32>
    %154 = arith.addf %152, %153 : vector<4x32xf32>
    %155 = math.tanh %154 : vector<4x32xf32>
    %156 = arith.mulf %151, %155 : vector<4x32xf32>
    %157 = vector.extract_strided_slice %156 {offsets = [0, 0], sizes = [2, 32], strides = [1, 1]} : vector<4x32xf32> to vector<2x32xf32>
    %158 = vector.extract_strided_slice %156 {offsets = [2, 0], sizes = [2, 32], strides = [1, 1]} : vector<4x32xf32> to vector<2x32xf32>
    %cst_21 = arith.constant dense<0.000000e+00> : vector<4x256xf32>
    %159 = tpu.matmul %156, %6, %cst_21 {dimension_numbers = #tpu.dot_dimension_numbers<[1], [0], [0], [1], [0, 0, 1, 1], [], []>} : vector<4x32xf32>, vector<32x256xf32>, vector<4x256xf32> -> vector<4x256xf32>
    %160 = vector.extract_strided_slice %5 {offsets = [12, 0], sizes = [2, 128], strides = [1, 1]} : vector<16x256xf32> to vector<2x128xf32>
    %161 = vector.extract_strided_slice %5 {offsets = [2, 128], sizes = [2, 128], strides = [1, 1]} : vector<16x256xf32> to vector<2x128xf32>
    %162 = vector.extract_strided_slice %159 {offsets = [0, 0], sizes = [2, 128], strides = [1, 1]} : vector<4x256xf32> to vector<2x128xf32>
    %163 = arith.addf %160, %162 : vector<2x128xf32>
    %164 = vector.extract_strided_slice %159 {offsets = [2, 128], sizes = [2, 128], strides = [1, 1]} : vector<4x256xf32> to vector<2x128xf32>
    %165 = arith.addf %161, %164 : vector<2x128xf32>
    %166 = tpu.concatenate %163, %165 in 0 : vector<2x128xf32>, vector<2x128xf32> -> vector<4x128xf32>
    %167 = arith.negf %166 : vector<4x128xf32>
    %168 = math.exp %167 : vector<4x128xf32>
    %cst_22 = arith.constant 1.000000e+00 : f32
    %169 = vector.broadcast %cst_22 : f32 to vector<4x128xf32>
    %170 = arith.addf %169, %168 : vector<4x128xf32>
    %171 = arith.divf %169, %170 : vector<4x128xf32>
    %172 = math.tanh %166 : vector<4x128xf32>
    %173 = vector.extract_strided_slice %171 {offsets = [0, 0], sizes = [4, 32], strides = [1, 1]} : vector<4x128xf32> to vector<4x32xf32>
    %174 = vector.extract_strided_slice %171 {offsets = [0, 32], sizes = [4, 32], strides = [1, 1]} : vector<4x128xf32> to vector<4x32xf32>
    %175 = vector.extract_strided_slice %172 {offsets = [0, 64], sizes = [4, 32], strides = [1, 1]} : vector<4x128xf32> to vector<4x32xf32>
    %176 = vector.extract_strided_slice %171 {offsets = [0, 96], sizes = [4, 32], strides = [1, 1]} : vector<4x128xf32> to vector<4x32xf32>
    %177 = arith.mulf %174, %154 : vector<4x32xf32>
    %178 = arith.mulf %173, %175 : vector<4x32xf32>
    %179 = arith.addf %177, %178 : vector<4x32xf32>
    %180 = math.tanh %179 : vector<4x32xf32>
    %181 = arith.mulf %176, %180 : vector<4x32xf32>
    %182 = vector.extract_strided_slice %181 {offsets = [0, 0], sizes = [2, 32], strides = [1, 1]} : vector<4x32xf32> to vector<2x32xf32>
    %183 = vector.extract_strided_slice %181 {offsets = [2, 0], sizes = [2, 32], strides = [1, 1]} : vector<4x32xf32> to vector<2x32xf32>
    %cst_23 = arith.constant dense<0.000000e+00> : vector<4x256xf32>
    %184 = tpu.matmul %181, %6, %cst_23 {dimension_numbers = #tpu.dot_dimension_numbers<[1], [0], [0], [1], [0, 0, 1, 1], [], []>} : vector<4x32xf32>, vector<32x256xf32>, vector<4x256xf32> -> vector<4x256xf32>
    %185 = vector.extract_strided_slice %5 {offsets = [14, 0], sizes = [2, 128], strides = [1, 1]} : vector<16x256xf32> to vector<2x128xf32>
    %186 = vector.extract_strided_slice %5 {offsets = [0, 128], sizes = [2, 128], strides = [1, 1]} : vector<16x256xf32> to vector<2x128xf32>
    %187 = vector.extract_strided_slice %184 {offsets = [0, 0], sizes = [2, 128], strides = [1, 1]} : vector<4x256xf32> to vector<2x128xf32>
    %188 = arith.addf %185, %187 : vector<2x128xf32>
    %189 = vector.extract_strided_slice %184 {offsets = [2, 128], sizes = [2, 128], strides = [1, 1]} : vector<4x256xf32> to vector<2x128xf32>
    %190 = arith.addf %186, %189 : vector<2x128xf32>
    %191 = tpu.concatenate %188, %190 in 0 : vector<2x128xf32>, vector<2x128xf32> -> vector<4x128xf32>
    %192 = arith.negf %191 : vector<4x128xf32>
    %193 = math.exp %192 : vector<4x128xf32>
    %cst_24 = arith.constant 1.000000e+00 : f32
    %194 = vector.broadcast %cst_24 : f32 to vector<4x128xf32>
    %195 = arith.addf %194, %193 : vector<4x128xf32>
    %196 = arith.divf %194, %195 : vector<4x128xf32>
    %197 = math.tanh %191 : vector<4x128xf32>
    %198 = vector.extract_strided_slice %196 {offsets = [0, 0], sizes = [4, 32], strides = [1, 1]} : vector<4x128xf32> to vector<4x32xf32>
    %199 = vector.extract_strided_slice %196 {offsets = [0, 32], sizes = [4, 32], strides = [1, 1]} : vector<4x128xf32> to vector<4x32xf32>
    %200 = vector.extract_strided_slice %197 {offsets = [0, 64], sizes = [4, 32], strides = [1, 1]} : vector<4x128xf32> to vector<4x32xf32>
    %201 = vector.extract_strided_slice %196 {offsets = [0, 96], sizes = [4, 32], strides = [1, 1]} : vector<4x128xf32> to vector<4x32xf32>
    %202 = arith.mulf %199, %179 : vector<4x32xf32>
    %203 = arith.mulf %198, %200 : vector<4x32xf32>
    %204 = arith.addf %202, %203 : vector<4x32xf32>
    %205 = math.tanh %204 : vector<4x32xf32>
    %206 = arith.mulf %201, %205 : vector<4x32xf32>
    %207 = vector.extract_strided_slice %206 {offsets = [0, 0], sizes = [2, 32], strides = [1, 1]} : vector<4x32xf32> to vector<2x32xf32>
    %208 = vector.extract_strided_slice %206 {offsets = [2, 0], sizes = [2, 32], strides = [1, 1]} : vector<4x32xf32> to vector<2x32xf32>
    %209 = tpu.concatenate %32, %57, %82, %107, %132, %157, %182, %207 in 0 : vector<2x32xf32>, vector<2x32xf32>, vector<2x32xf32>, vector<2x32xf32>, vector<2x32xf32>, vector<2x32xf32>, vector<2x32xf32>, vector<2x32xf32> -> vector<16x32xf32>
    %210 = tpu.concatenate %208, %183, %158, %133, %108, %83, %58, %33 in 0 : vector<2x32xf32>, vector<2x32xf32>, vector<2x32xf32>, vector<2x32xf32>, vector<2x32xf32>, vector<2x32xf32>, vector<2x32xf32>, vector<2x32xf32> -> vector<16x32xf32>
    %211 = tpu.concatenate %209, %210 in 1 : vector<16x32xf32>, vector<16x32xf32> -> vector<16x64xf32>
    %c0_25 = arith.constant 0 : index
    %c0_26 = arith.constant 0 : index
    %212 = vector.load %arg5[%c0_25, %c0_26] : memref<64x16xf32, #tpu.memory_space<vmem>>, vector<64x16xf32>
    %cst_27 = arith.constant dense<0.000000e+00> : vector<16x16xf32>
    %213 = tpu.matmul %211, %212, %cst_27 {dimension_numbers = #tpu.dot_dimension_numbers<[1], [0], [0], [1], [0, 0, 1, 1], [], []>} : vector<16x64xf32>, vector<64x16xf32>, vector<16x16xf32> -> vector<16x16xf32>
    %c0_28 = arith.constant 0 : index
    %c0_29 = arith.constant 0 : index
    %214 = vector.load %arg6[%c0_28, %c0_29] : memref<1x16xf32, #tpu.memory_space<vmem>>, vector<1x16xf32>
    %215 = vector.broadcast %214 : vector<1x16xf32> to vector<16x16xf32>
    %216 = arith.addf %213, %215 : vector<16x16xf32>
    %cst_30 = arith.constant dense<0xFF800000> : vector<16xf32>
    %217 = vector.multi_reduction <maximumf>, %216, %cst_30 [1] : vector<16x16xf32> to vector<16xf32>
    %218 = vector.shape_cast %217 : vector<16xf32> to vector<16x1xf32>
    %219 = vector.broadcast %218 : vector<16x1xf32> to vector<16x16xf32>
    %220 = arith.subf %216, %219 : vector<16x16xf32>
    %221 = math.exp %220 : vector<16x16xf32>
    %cst_31 = arith.constant dense<0.000000e+00> : vector<16xf32>
    %222 = vector.multi_reduction <add>, %221, %cst_31 [1] : vector<16x16xf32> to vector<16xf32>
    %223 = vector.shape_cast %222 : vector<16xf32> to vector<16x1xf32>
    %224 = math.log %223 : vector<16x1xf32>
    %225 = vector.broadcast %224 : vector<16x1xf32> to vector<16x16xf32>
    %226 = arith.subf %220, %225 : vector<16x16xf32>
    %c0_32 = arith.constant 0 : index
    %c0_33 = arith.constant 0 : index
    %227 = vector.load %arg7[%c0_32, %c0_33] : memref<16x16xf32, #tpu.memory_space<vmem>>, vector<16x16xf32>
    tpu.vector_store %arg7[%c0_32, %c0_33], %226 {strides = array<i32>} : memref<16x16xf32, #tpu.memory_space<vmem>>, vector<16x16xf32>,
    return
  }
  func.func @transform_0(%arg0: i32) -> (i32, i32) {
    %c0_i32 = arith.constant 0 : i32
    %c0_i32_0 = arith.constant 0 : i32
    %c0_i32_1 = arith.constant 0 : i32
    return %c0_i32, %c0_i32_0 : i32, i32
  }
  func.func @transform_1(%arg0: i32) -> (i32, i32) {
    %c0_i32 = arith.constant 0 : i32
    %c0_i32_0 = arith.constant 0 : i32
    %c0_i32_1 = arith.constant 0 : i32
    return %c0_i32, %c0_i32_0 : i32, i32
  }
  func.func @transform_2(%arg0: i32) -> (i32, i32) {
    %c0_i32 = arith.constant 0 : i32
    %c0_i32_0 = arith.constant 0 : i32
    %c0_i32_1 = arith.constant 0 : i32
    return %c0_i32, %c0_i32_0 : i32, i32
  }
  func.func @transform_3(%arg0: i32) -> (i32, i32) {
    %c0_i32 = arith.constant 0 : i32
    %c0_i32_0 = arith.constant 0 : i32
    %c0_i32_1 = arith.constant 0 : i32
    return %c0_i32, %c0_i32_0 : i32, i32
  }
  func.func @transform_4(%arg0: i32) -> (i32, i32) {
    %c0_i32 = arith.constant 0 : i32
    %c0_i32_0 = arith.constant 0 : i32
    %c0_i32_1 = arith.constant 0 : i32
    return %c0_i32, %c0_i32_0 : i32, i32
  }
  func.func @transform_5(%arg0: i32) -> (i32, i32) {
    %c0_i32 = arith.constant 0 : i32
    %c0_i32_0 = arith.constant 0 : i32
    %c0_i32_1 = arith.constant 0 : i32
    return %c0_i32, %c0_i32_0 : i32, i32
  }
  func.func @transform_6(%arg0: i32) -> (i32, i32) {
    %c0_i32 = arith.constant 0 : i32
    %c0_i32_0 = arith.constant 0 : i32
    %c0_i32_1 = arith.constant 0 : i32
    return %c0_i32, %c0_i32_0 : i32, i32
  }
}

</mosaic_0001>

<llo_original>
// kernel: tpu_custom_call.1
$region0: #{tpu_custom_call.1}
  #allocation0 [shape = 'u32[]', space=smem, size = 0x4, offset = 0x4, fixed_abs, tag = 'smem constant byte address 0x4 - core index']
  #allocation1 [shape = 'u32[144,128]{1,0:T(1,128)}', space=vmem, size = 0x12000, scoped, tag = 'internal scratch']
  %s0 = inlined_call_operand.vmem [shape: f32[16,32], index: 0, kind: input, shape index: {}]
  %s1 = inlined_call_operand.vmem [shape: f32[32,256], index: 1, kind: input, shape index: {}]
  %s2 = inlined_call_operand.hbm [shape: f32[32,256], index: 2, kind: input, shape index: {}]
  %s3 = inlined_call_operand.vmem [shape: f32[1,256], index: 3, kind: input, shape index: {}]
  %s4 = inlined_call_operand.vmem [shape: f32[64,16], index: 4, kind: input, shape index: {}]
  %s5 = inlined_call_operand.vmem [shape: f32[1,16], index: 5, kind: input, shape index: {}]
  %s6 = inlined_call_operand.hbm [shape: f32[16,16], index: 6, kind: output, shape index: {}]
  %s7 = sld [smem:[#allocation0]]
  $region38: #{tpu_custom_call.1} parent=0
    _
  %s9 = ssub.s32 1, %s7
  %s10 = scalar_select 0, %s9, %s7
  $region1: #{tpu_custom_call.1} parent=0
    #allocation2 [shape = 'u8[32768]{0}', space=vmem, size = 0x8000, scoped, tag = 'input window, operand 2, single buffered']
    #allocation3 [shape = 's32[1]{0}', space=sflag, size = 0x4, scoped, tag = 'scoped memory for tpu_custom_call.1']
    #allocation4 [shape = 's32[1]{0}', space=sflag, size = 0x4, scoped, tag = 'scoped memory for tpu_custom_call.1']
    #allocation5 [shape = 'u8[8192]{0}', space=vmem, size = 0x2000, scoped, tag = 'output window, operand 0, single buffered']
    %11 = vsyncpa [#allocation3], 0
    %12 = vsyncpa [#allocation4], 0
    // Predicated region
    $region2: #{tpu_custom_call.1} parent=1 // pred_check
      _
    $region3: #{tpu_custom_call.1} parent=1 // pred_check_branch
      %14 = sbr.rel (0) target = $region5
    $region4: #{tpu_custom_call.1} parent=1 // pred_region
      _
    $region5: #{tpu_custom_call.1} parent=1 // pred_fallthru
      _
    // Predicated region
    $region6: #{tpu_custom_call.1} parent=1 // pred_check
      _
    $region7: #{tpu_custom_call.1} parent=1 // pred_check_branch
      %16 = sbr.rel (0) target = $region9
    $region8: #{tpu_custom_call.1} parent=1 // pred_region
      _
    $region9: #{tpu_custom_call.1} parent=1 // pred_fallthru
      _
    // Predicated region
    $region10: #{tpu_custom_call.1} parent=1 // pred_check
      _
    $region11: #{tpu_custom_call.1} parent=1 // pred_check_branch
      %18 = sbr.rel (0) target = $region13
    $region12: #{tpu_custom_call.1} parent=1 // pred_region
      %s20 = ssub.s32 1024, 1024
      %21 = vsyncadd [#allocation3], %s20
      %s22 = sshll.u32 [#allocation2], 4
      %s23 = int_to_ptr.vmem [resolvable:$true] %s22
      %28 = dma.hbm_to_vmem [thread:$0]  %s2, 1024, %s23, [#allocation3], 256, 256, 16
    $region13: #{tpu_custom_call.1} parent=1 // pred_fallthru
      _
    // Predicated region
    $region14: #{tpu_custom_call.1} parent=1 // pred_check
      _
    $region15: #{tpu_custom_call.1} parent=1 // pred_check_branch
      %30 = sbr.rel (0) target = $region17
    $region16: #{tpu_custom_call.1} parent=1 // pred_region
      _
    $region17: #{tpu_custom_call.1} parent=1 // pred_fallthru
      _
    // Predicated region
    $region18: #{tpu_custom_call.1} parent=1 // pred_check
      _
    $region19: #{tpu_custom_call.1} parent=1 // pred_check_branch
      %32 = sbr.rel (0) target = $region21
    $region20: #{tpu_custom_call.1} parent=1 // pred_region
      _
    $region21: #{tpu_custom_call.1} parent=1 // pred_fallthru
      _
    // Predicated region
    $region22: #{tpu_custom_call.1} parent=1 // pred_check
      _
    $region23: #{tpu_custom_call.1} parent=1 // pred_check_branch
      %34 = sbr.rel (0) target = $region25
    $region24: #{tpu_custom_call.1} parent=1 // pred_region
      _
    $region25: #{tpu_custom_call.1} parent=1 // pred_fallthru
      _
    // Predicated region
    $region26: #{tpu_custom_call.1} parent=1 // pred_check
      _
    $region27: #{tpu_custom_call.1} parent=1 // pred_check_branch
      %36 = sbr.rel (0) target = $region29
    $region28: #{tpu_custom_call.1} parent=1 // pred_region
      %37 = dma.done [#allocation3], 1024
    $region29: #{tpu_custom_call.1} parent=1 // pred_fallthru
      _
    %v38 = vld [vmem:[%s0] sm:$0xff]
    %v39 = vld [vmem:[%s0 + $0x8] sm:$0xff]
    %v40 = vld [vmem:[%s1] sm:$0xff]
    %v41 = vld [vmem:[%s1 + $0x8] sm:$0xff]
    %v42 = vld [vmem:[%s1 + $0x10] sm:$0xff]
    %v43 = vld [vmem:[%s1 + $0x18] sm:$0xff]
    %v44 = vld [vmem:[%s1 + $0x20] sm:$0xff]
    %v45 = vld [vmem:[%s1 + $0x28] sm:$0xff]
    %v46 = vld [vmem:[%s1 + $0x30] sm:$0xff]
    %v47 = vld [vmem:[%s1 + $0x38] sm:$0xff]
    %v48 = vld [vmem:[%s3] sm:$0x3]
    %v50 = vlaneseq
    %v51 = vshrl.u32 %v50, 7
    %v52 = vsub.s32 0, %v51
    %v53 = vrot.slane %v48, %v52
    %v54 = vlaneseq
    %v55 = vshrl.u32 %v54, 7
    %v56 = vsub.s32 1, %v55
    %v57 = vrot.slane %v48, %v56
    %vm60 = vcmask 261120
    %v62 = vsel %vm60, %v38, 0
    %v65 = vsel %vm60, %v39, 0
    %67 = vmatprep.subr.mxu0 0.0
    %68 = vmatpush1.msra.mxu0 0.0
    %69 = vmatprep.subr.mxu0 0.0
    %70 = vmatpush1.msra.mxu0 0.0
    %71 = vmatprep.subr.mxu0 0.0
    %72 = vmatpush1.msra.mxu0 0.0
    %73 = vmatprep.subr.mxu0 0.0
    %74 = vmatpush1.msra.mxu0 0.0
    %75 = vmatprep.subr.mxu0 0.0
    %76 = vmatpush1.msra.mxu0 0.0
    %77 = vmatprep.subr.mxu0 0.0
    %78 = vmatpush1.msra.mxu0 0.0
    %79 = vmatprep.subr.mxu0 0.0
    %80 = vmatpush1.msra.mxu0 0.0
    %81 = vmatprep.subr.mxu0 0.0
    %82 = vmatpush1.msra.mxu0 0.0
    %83 = vmatprep.subr.mxu0 0.0
    %84 = vmatpush1.msra.mxu0 0.0
    %85 = vmatprep.subr.mxu0 0.0
    %86 = vmatpush1.msra.mxu0 0.0
    %87 = vmatprep.subr.mxu0 0.0
    %88 = vmatpush1.msra.mxu0 0.0
    %89 = vmatprep.subr.mxu0 0.0
    %90 = vmatpush1.msra.mxu0 0.0
    %91 = vmatprep.subr.mxu0 %v47
    %92 = vmatpush1.msra.mxu0 %v46
    %93 = vmatprep.subr.mxu0 %v45
    %94 = vmatpush1.msra.mxu0 %v44
    %95 = vmatprep.subr.mxu0 %v43
    %96 = vmatpush1.msra.mxu0 %v42
    %97 = vmatprep.subr.mxu0 %v41
    %98 = vmatpush1.msra.mxu0 %v40
    %99 = vmatprep.subr.mxu0 0.0
    %100 = vmatpush2.msra.mxu0 0.0
    %101 = vmatprep.subr.mxu0 0.0
    %102 = vmatpush2.msra.mxu0 0.0
    %103 = vmatprep.subr.mxu0 0.0
    %104 = vmatpush2.msra.mxu0 0.0
    %105 = vmatprep.subr.mxu0 0.0
    %106 = vmatpush2.msra.mxu0 0.0
    %107 = vmatprep.subr.mxu0 0.0
    %108 = vmatpush2.msra.mxu0 0.0
    %109 = vmatprep.subr.mxu0 0.0
    %110 = vmatpush2.msra.mxu0 0.0
    %111 = vmatprep.subr.mxu0 0.0
    %112 = vmatpush2.msra.mxu0 0.0
    %113 = vmatprep.subr.mxu0 0.0
    %114 = vmatpush2.msra.mxu0 0.0
    %115 = vmatprep.subr.mxu0 0.0
    %116 = vmatpush2.msra.mxu0 0.0
    %117 = vmatprep.subr.mxu0 0.0
    %118 = vmatpush2.msra.mxu0 0.0
    %119 = vmatprep.subr.mxu0 0.0
    %120 = vmatpush2.msra.mxu0 0.0
    %121 = vmatprep.subr.mxu0 0.0
    %122 = vmatpush2.msra.mxu0 0.0
    %123 = vmatprep.subr.mxu0 0.0
    %124 = vmatpush2.msra.mxu0 0.0
    %125 = vmatprep.subr.mxu0 0.0
    %126 = vmatpush2.msra.mxu0 0.0
    %127 = vmatprep.subr.mxu0 0.0
    %128 = vmatpush2.msra.mxu0 0.0
    %129 = vmatprep.subr.mxu0 0.0
    %130 = vmatpush2.msra.mxu0 0.0
    %131 = vmatprep.mubr.f32.mxu0 0.0
    %132 = vmatmul.mubr.f32.gmra.mxu0 %v62
    %v133 = vpop.f32.mrf.mxu0
    %v134 = vadd.f32 %v53, %v133
    %v135 = vpop.f32.mrf.mxu0
    %v136 = vadd.f32 %v57, %v135
    %137 = vmatprep.mubr.f32.mxu0 0.0
    %138 = vmatmul.mubr.f32.gmra.mxu0 %v65
    %v139 = vpop.f32.mrf.mxu0
    %v140 = vadd.f32 %v53, %v139
    %v141 = vpop.f32.mrf.mxu0
    %v142 = vadd.f32 %v57, %v141
    %143 = vdwg.mxu0
    %v144 = vld [vmem:[#allocation2] sm:$0xff]
    %v145 = vld [vmem:[#allocation2 + $0x8] sm:$0xff]
    %v146 = vld [vmem:[#allocation2 + $0x10] sm:$0xff]
    %v147 = vld [vmem:[#allocation2 + $0x18] sm:$0xff]
    %v148 = vld [vmem:[#allocation2 + $0x20] sm:$0xff]
    %v149 = vld [vmem:[#allocation2 + $0x28] sm:$0xff]
    %v150 = vld [vmem:[#allocation2 + $0x30] sm:$0xff]
    %v151 = vld [vmem:[#allocation2 + $0x38] sm:$0xff]
    %v153 = vsel %vm60, 0.0, 0
    %155 = vmatprep.subr.mxu0 0.0
    %156 = vmatpush1.msra.mxu0 0.0
    %157 = vmatprep.subr.mxu0 0.0
    %158 = vmatpush1.msra.mxu0 0.0
    %159 = vmatprep.subr.mxu0 0.0
    %160 = vmatpush1.msra.mxu0 0.0
    %161 = vmatprep.subr.mxu0 0.0
    %162 = vmatpush1.msra.mxu0 0.0
    %163 = vmatprep.subr.mxu0 0.0
    %164 = vmatpush1.msra.mxu0 0.0
    %165 = vmatprep.subr.mxu0 0.0
    %166 = vmatpush1.msra.mxu0 0.0
    %167 = vmatprep.subr.mxu0 0.0
    %168 = vmatpush1.msra.mxu0 0.0
    %169 = vmatprep.subr.mxu0 0.0
    %170 = vmatpush1.msra.mxu0 0.0
    %171 = vmatprep.subr.mxu0 0.0
    %172 = vmatpush1.msra.mxu0 0.0
    %173 = vmatprep.subr.mxu0 0.0
    %174 = vmatpush1.msra.mxu0 0.0
    %175 = vmatprep.subr.mxu0 0.0
    %176 = vmatpush1.msra.mxu0 0.0
    %177 = vmatprep.subr.mxu0 0.0
    %178 = vmatpush1.msra.mxu0 0.0
    %179 = vmatprep.subr.mxu0 %v151
    %180 = vmatpush1.msra.mxu0 %v150
    %181 = vmatprep.subr.mxu0 %v149
    %182 = vmatpush1.msra.mxu0 %v148
    %183 = vmatprep.subr.mxu0 %v147
    %184 = vmatpush1.msra.mxu0 %v146
    %185 = vmatprep.subr.mxu0 %v145
    %186 = vmatpush1.msra.mxu0 %v144
    %187 = vmatprep.subr.mxu0 0.0
    %188 = vmatpush2.msra.mxu0 0.0
    %189 = vmatprep.subr.mxu0 0.0
    %190 = vmatpush2.msra.mxu0 0.0
    %191 = vmatprep.subr.mxu0 0.0
    %192 = vmatpush2.msra.mxu0 0.0
    %193 = vmatprep.subr.mxu0 0.0
    %194 = vmatpush2.msra.mxu0 0.0
    %195 = vmatprep.subr.mxu0 0.0
    %196 = vmatpush2.msra.mxu0 0.0
    %197 = vmatprep.subr.mxu0 0.0
    %198 = vmatpush2.msra.mxu0 0.0
    %199 = vmatprep.subr.mxu0 0.0
    %200 = vmatpush2.msra.mxu0 0.0
    %201 = vmatprep.subr.mxu0 0.0
    %202 = vmatpush2.msra.mxu0 0.0
    %203 = vmatprep.subr.mxu0 0.0
    %204 = vmatpush2.msra.mxu0 0.0
    %205 = vmatprep.subr.mxu0 0.0
    %206 = vmatpush2.msra.mxu0 0.0
    %207 = vmatprep.subr.mxu0 0.0
    %208 = vmatpush2.msra.mxu0 0.0
    %209 = vmatprep.subr.mxu0 0.0
    %210 = vmatpush2.msra.mxu0 0.0
    %211 = vmatprep.subr.mxu0 0.0
    %212 = vmatpush2.msra.mxu0 0.0
    %213 = vmatprep.subr.mxu0 0.0
    %214 = vmatpush2.msra.mxu0 0.0
    %215 = vmatprep.subr.mxu0 0.0
    %216 = vmatpush2.msra.mxu0 0.0
    %217 = vmatprep.subr.mxu0 0.0
    %218 = vmatpush2.msra.mxu0 0.0
    %219 = vmatprep.mubr.f32.mxu0 0.0
    %220 = vmatmul.mubr.f32.gmra.mxu0 %v153
    %v221 = vpop.f32.mrf.mxu0
    %v222 = vadd.f32 0.0, %v221
    %v223 = vpop.f32.mrf.mxu0
    %v224 = vadd.f32 0.0, %v223
    %225 = vdwg.mxu0
    %v226 = vadd.f32 %v134, %v222
    %v228 = vrot.slane %v224, 4
    %v230 = vadd.f32 %v142, %v228
    %v232 = vrot.slane %v230, 4
    %vm234 = vcmask 1041408
    %v235 = vsel %vm234, %v226, %v232
    %v236 = vxor.u32 %v235, 2147483648
    %v237 = vmul.f32 %v236, 1.442695
    %v238 = vpow.pop %v237
    %v239 = vadd.f32 %v238, 1.0
    %v240 = vrcp.pop %v239
    %v241 = vmul.f32 1.0, %v240
    %v242 = vtanh.pop %v235
    %v243 = vmul.f32 %v241, 0.0
    %245 = vrot.lane.b32.xlu0 %v242, 64
    %v246 = vpop.permute.xlu0 %245
    %v248 = vmul.f32 %v241, %v246
    %250 = vrot.lane.b32.xlu0 %v248, 32
    %v251 = vpop.permute.xlu0 %250
    %v253 = vadd.f32 %v243, %v251
    %v254 = vtanh.pop %v253
    %256 = vrot.lane.b32.xlu0 %v254, 64
    %v257 = vpop.permute.xlu0 %256
    %v259 = vmul.f32 %v241, %v257
    %261 = vrot.lane.b32.xlu0 %v259, 32
    %v262 = vpop.permute.xlu0 %261
    %v263 = vsel %vm60, %v262, 0
    %265 = vmatprep.subr.mxu0 0.0
    %266 = vmatpush1.msra.mxu0 0.0
    %267 = vmatprep.subr.mxu0 0.0
    %268 = vmatpush1.msra.mxu0 0.0
    %269 = vmatprep.subr.mxu0 0.0
    %270 = vmatpush1.msra.mxu0 0.0
    %271 = vmatprep.subr.mxu0 0.0
    %272 = vmatpush1.msra.mxu0 0.0
    %273 = vmatprep.subr.mxu0 0.0
    %274 = vmatpush1.msra.mxu0 0.0
    %275 = vmatprep.subr.mxu0 0.0
    %276 = vmatpush1.msra.mxu0 0.0
    %277 = vmatprep.subr.mxu0 0.0
    %278 = vmatpush1.msra.mxu0 0.0
    %279 = vmatprep.subr.mxu0 0.0
    %280 = vmatpush1.msra.mxu0 0.0
    %281 = vmatprep.subr.mxu0 0.0
    %282 = vmatpush1.msra.mxu0 0.0
    %283 = vmatprep.subr.mxu0 0.0
    %284 = vmatpush1.msra.mxu0 0.0
    %285 = vmatprep.subr.mxu0 0.0
    %286 = vmatpush1.msra.mxu0 0.0
    %287 = vmatprep.subr.mxu0 0.0
    %288 = vmatpush1.msra.mxu0 0.0
    %289 = vmatprep.subr.mxu0 %v151
    %290 = vmatpush1.msra.mxu0 %v150
    %291 = vmatprep.subr.mxu0 %v149
    %292 = vmatpush1.msra.mxu0 %v148
    %293 = vmatprep.subr.mxu0 %v147
    %294 = vmatpush1.msra.mxu0 %v146
    %295 = vmatprep.subr.mxu0 %v145
    %296 = vmatpush1.msra.mxu0 %v144
    %297 = vmatprep.subr.mxu0 0.0
    %298 = vmatpush2.msra.mxu0 0.0
    %299 = vmatprep.subr.mxu0 0.0
    %300 = vmatpush2.msra.mxu0 0.0
    %301 = vmatprep.subr.mxu0 0.0
    %302 = vmatpush2.msra.mxu0 0.0
    %303 = vmatprep.subr.mxu0 0.0
    %304 = vmatpush2.msra.mxu0 0.0
    %305 = vmatprep.subr.mxu0 0.0
    %306 = vmatpush2.msra.mxu0 0.0
    %307 = vmatprep.subr.mxu0 0.0
    %308 = vmatpush2.msra.mxu0 0.0
    %309 = vmatprep.subr.mxu0 0.0
    %310 = vmatpush2.msra.mxu0 0.0
    %311 = vmatprep.subr.mxu0 0.0
    %312 = vmatpush2.msra.mxu0 0.0
    %313 = vmatprep.subr.mxu0 0.0
    %314 = vmatpush2.msra.mxu0 0.0
    %315 = vmatprep.subr.mxu0 0.0
    %316 = vmatpush2.msra.mxu0 0.0
    %317 = vmatprep.subr.mxu0 0.0
    %318 = vmatpush2.msra.mxu0 0.0
    %319 = vmatprep.subr.mxu0 0.0
    %320 = vmatpush2.msra.mxu0 0.0
    %321 = vmatprep.subr.mxu0 0.0
    %322 = vmatpush2.msra.mxu0 0.0
    %323 = vmatprep.subr.mxu0 0.0
    %324 = vmatpush2.msra.mxu0 0.0
    %325 = vmatprep.subr.mxu0 0.0
    %326 = vmatpush2.msra.mxu0 0.0
    %327 = vmatprep.subr.mxu0 0.0
    %328 = vmatpush2.msra.mxu0 0.0
    %329 = vmatprep.mubr.f32.mxu0 0.0
    %330 = vmatmul.mubr.f32.gmra.mxu0 %v263
    %v331 = vpop.f32.mrf.mxu0
    %v332 = vadd.f32 0.0, %v331
    %v333 = vpop.f32.mrf.mxu0
    %v334 = vadd.f32 0.0, %v333
    %335 = vdwg.mxu0
    %v337 = vrot.slane %v332, 6
    %v339 = vadd.f32 %v134, %v337
    %v341 = vrot.slane %v334, 6
    %v343 = vadd.f32 %v142, %v341
    %v345 = vrot.slane %v339, 2
    %v348 = vrot.slane %v343, 2
    %v350 = vsel %vm234, %v345, %v348
    %v351 = vxor.u32 %v350, 2147483648
    %v352 = vmul.f32 %v351, 1.442695
    %v353 = vpow.pop %v352
    %v354 = vadd.f32 %v353, 1.0
    %v355 = vrcp.pop %v354
    %v356 = vmul.f32 1.0, %v355
    %v357 = vtanh.pop %v350
    %v358 = vmul.f32 %v356, %v253
    %360 = vrot.lane.b32.xlu0 %v357, 64
    %v361 = vpop.permute.xlu0 %360
    %v363 = vmul.f32 %v356, %v361
    %365 = vrot.lane.b32.xlu0 %v363, 32
    %v366 = vpop.permute.xlu0 %365
    %v368 = vadd.f32 %v358, %v366
    %v369 = vtanh.pop %v368
    %371 = vrot.lane.b32.xlu0 %v369, 64
    %v372 = vpop.permute.xlu0 %371
    %v374 = vmul.f32 %v356, %v372
    %376 = vrot.lane.b32.xlu0 %v374, 32
    %v377 = vpop.permute.xlu0 %376
    %v378 = vsel %vm60, %v377, 0
    %380 = vmatprep.subr.mxu0 0.0
    %381 = vmatpush1.msra.mxu0 0.0
    %382 = vmatprep.subr.mxu0 0.0
    %383 = vmatpush1.msra.mxu0 0.0
    %384 = vmatprep.subr.mxu0 0.0
    %385 = vmatpush1.msra.mxu0 0.0
    %386 = vmatprep.subr.mxu0 0.0
    %387 = vmatpush1.msra.mxu0 0.0
    %388 = vmatprep.subr.mxu0 0.0
    %389 = vmatpush1.msra.mxu0 0.0
    %390 = vmatprep.subr.mxu0 0.0
    %391 = vmatpush1.msra.mxu0 0.0
    %392 = vmatprep.subr.mxu0 0.0
    %393 = vmatpush1.msra.mxu0 0.0
    %394 = vmatprep.subr.mxu0 0.0
    %395 = vmatpush1.msra.mxu0 0.0
    %396 = vmatprep.subr.mxu0 0.0
    %397 = vmatpush1.msra.mxu0 0.0
    %398 = vmatprep.subr.mxu0 0.0
    %399 = vmatpush1.msra.mxu0 0.0
    %400 = vmatprep.subr.mxu0 0.0
    %401 = vmatpush1.msra.mxu0 0.0
    %402 = vmatprep.subr.mxu0 0.0
    %403 = vmatpush1.msra.mxu0 0.0
    %404 = vmatprep.subr.mxu0 %v151
    %405 = vmatpush1.msra.mxu0 %v150
    %406 = vmatprep.subr.mxu0 %v149
    %407 = vmatpush1.msra.mxu0 %v148
    %408 = vmatprep.subr.mxu0 %v147
    %409 = vmatpush1.msra.mxu0 %v146
    %410 = vmatprep.subr.mxu0 %v145
    %411 = vmatpush1.msra.mxu0 %v144
    %412 = vmatprep.subr.mxu0 0.0
    %413 = vmatpush2.msra.mxu0 0.0
    %414 = vmatprep.subr.mxu0 0.0
    %415 = vmatpush2.msra.mxu0 0.0
    %416 = vmatprep.subr.mxu0 0.0
    %417 = vmatpush2.msra.mxu0 0.0
    %418 = vmatprep.subr.mxu0 0.0
    %419 = vmatpush2.msra.mxu0 0.0
    %420 = vmatprep.subr.mxu0 0.0
    %421 = vmatpush2.msra.mxu0 0.0
    %422 = vmatprep.subr.mxu0 0.0
    %423 = vmatpush2.msra.mxu0 0.0
    %424 = vmatprep.subr.mxu0 0.0
    %425 = vmatpush2.msra.mxu0 0.0
    %426 = vmatprep.subr.mxu0 0.0
    %427 = vmatpush2.msra.mxu0 0.0
    %428 = vmatprep.subr.mxu0 0.0
    %429 = vmatpush2.msra.mxu0 0.0
    %430 = vmatprep.subr.mxu0 0.0
    %431 = vmatpush2.msra.mxu0 0.0
    %432 = vmatprep.subr.mxu0 0.0
    %433 = vmatpush2.msra.mxu0 0.0
    %434 = vmatprep.subr.mxu0 0.0
    %435 = vmatpush2.msra.mxu0 0.0
    %436 = vmatprep.subr.mxu0 0.0
    %437 = vmatpush2.msra.mxu0 0.0
    %438 = vmatprep.subr.mxu0 0.0
    %439 = vmatpush2.msra.mxu0 0.0
    %440 = vmatprep.subr.mxu0 0.0
    %441 = vmatpush2.msra.mxu0 0.0
    %442 = vmatprep.subr.mxu0 0.0
    %443 = vmatpush2.msra.mxu0 0.0
    %444 = vmatprep.mubr.f32.mxu0 0.0
    %445 = vmatmul.mubr.f32.gmra.mxu0 %v378
    %v446 = vpop.f32.mrf.mxu0
    %v447 = vadd.f32 0.0, %v446
    %v448 = vpop.f32.mrf.mxu0
    %v449 = vadd.f32 0.0, %v448
    %450 = vdwg.mxu0
    %v452 = vrot.slane %v447, 4
    %v454 = vadd.f32 %v134, %v452
    %v455 = vadd.f32 %v142, %v449
    %v457 = vrot.slane %v454, 4
    %v459 = vsel %vm234, %v457, %v455
    %v460 = vxor.u32 %v459, 2147483648
    %v461 = vmul.f32 %v460, 1.442695
    %v462 = vpow.pop %v461
    %v463 = vadd.f32 %v462, 1.0
    %v464 = vrcp.pop %v463
    %v465 = vmul.f32 1.0, %v464
    %v466 = vtanh.pop %v459
    %v467 = vmul.f32 %v465, %v368
    %469 = vrot.lane.b32.xlu0 %v466, 64
    %v470 = vpop.permute.xlu0 %469
    %v472 = vmul.f32 %v465, %v470
    %474 = vrot.lane.b32.xlu0 %v472, 32
    %v475 = vpop.permute.xlu0 %474
    %v477 = vadd.f32 %v467, %v475
    %v478 = vtanh.pop %v477
    %480 = vrot.lane.b32.xlu0 %v478, 64
    %v481 = vpop.permute.xlu0 %480
    %v483 = vmul.f32 %v465, %v481
    %485 = vrot.lane.b32.xlu0 %v483, 32
    %v486 = vpop.permute.xlu0 %485
    %v487 = vsel %vm60, %v486, 0
    %489 = vmatprep.subr.mxu0 0.0
    %490 = vmatpush1.msra.mxu0 0.0
    %491 = vmatprep.subr.mxu0 0.0
    %492 = vmatpush1.msra.mxu0 0.0
    %493 = vmatprep.subr.mxu0 0.0
    %494 = vmatpush1.msra.mxu0 0.0
    %495 = vmatprep.subr.mxu0 0.0
    %496 = vmatpush1.msra.mxu0 0.0
    %497 = vmatprep.subr.mxu0 0.0
    %498 = vmatpush1.msra.mxu0 0.0
    %499 = vmatprep.subr.mxu0 0.0
    %500 = vmatpush1.msra.mxu0 0.0
    %501 = vmatprep.subr.mxu0 0.0
    %502 = vmatpush1.msra.mxu0 0.0
    %503 = vmatprep.subr.mxu0 0.0
    %504 = vmatpush1.msra.mxu0 0.0
    %505 = vmatprep.subr.mxu0 0.0
    %506 = vmatpush1.msra.mxu0 0.0
    %507 = vmatprep.subr.mxu0 0.0
    %508 = vmatpush1.msra.mxu0 0.0
    %509 = vmatprep.subr.mxu0 0.0
    %510 = vmatpush1.msra.mxu0 0.0
    %511 = vmatprep.subr.mxu0 0.0
    %512 = vmatpush1.msra.mxu0 0.0
    %513 = vmatprep.subr.mxu0 %v151
    %514 = vmatpush1.msra.mxu0 %v150
    %515 = vmatprep.subr.mxu0 %v149
    %516 = vmatpush1.msra.mxu0 %v148
    %517 = vmatprep.subr.mxu0 %v147
    %518 = vmatpush1.msra.mxu0 %v146
    %519 = vmatprep.subr.mxu0 %v145
    %520 = vmatpush1.msra.mxu0 %v144
    %521 = vmatprep.subr.mxu0 0.0
    %522 = vmatpush2.msra.mxu0 0.0
    %523 = vmatprep.subr.mxu0 0.0
    %524 = vmatpush2.msra.mxu0 0.0
    %525 = vmatprep.subr.mxu0 0.0
    %526 = vmatpush2.msra.mxu0 0.0
    %527 = vmatprep.subr.mxu0 0.0
    %528 = vmatpush2.msra.mxu0 0.0
    %529 = vmatprep.subr.mxu0 0.0
    %530 = vmatpush2.msra.mxu0 0.0
    %531 = vmatprep.subr.mxu0 0.0
    %532 = vmatpush2.msra.mxu0 0.0
    %533 = vmatprep.subr.mxu0 0.0
    %534 = vmatpush2.msra.mxu0 0.0
    %535 = vmatprep.subr.mxu0 0.0
    %536 = vmatpush2.msra.mxu0 0.0
    %537 = vmatprep.subr.mxu0 0.0
    %538 = vmatpush2.msra.mxu0 0.0
    %539 = vmatprep.subr.mxu0 0.0
    %540 = vmatpush2.msra.mxu0 0.0
    %541 = vmatprep.subr.mxu0 0.0
    %542 = vmatpush2.msra.mxu0 0.0
    %543 = vmatprep.subr.mxu0 0.0
    %544 = vmatpush2.msra.mxu0 0.0
    %545 = vmatprep.subr.mxu0 0.0
    %546 = vmatpush2.msra.mxu0 0.0
    %547 = vmatprep.subr.mxu0 0.0
    %548 = vmatpush2.msra.mxu0 0.0
    %549 = vmatprep.subr.mxu0 0.0
    %550 = vmatpush2.msra.mxu0 0.0
    %551 = vmatprep.subr.mxu0 0.0
    %552 = vmatpush2.msra.mxu0 0.0
    %553 = vmatprep.mubr.f32.mxu0 0.0
    %554 = vmatmul.mubr.f32.gmra.mxu0 %v487
    %v555 = vpop.f32.mrf.mxu0
    %v556 = vadd.f32 0.0, %v555
    %v557 = vpop.f32.mrf.mxu0
    %v558 = vadd.f32 0.0, %v557
    %559 = vdwg.mxu0
    %v561 = vrot.slane %v556, 2
    %v563 = vadd.f32 %v134, %v561
    %v565 = vrot.slane %v558, 2
    %v567 = vadd.f32 %v142, %v565
    %v569 = vrot.slane %v563, 6
    %v572 = vrot.slane %v567, 6
    %v574 = vsel %vm234, %v569, %v572
    %v575 = vxor.u32 %v574, 2147483648
    %v576 = vmul.f32 %v575, 1.442695
    %v577 = vpow.pop %v576
    %v578 = vadd.f32 %v577, 1.0
    %v579 = vrcp.pop %v578
    %v580 = vmul.f32 1.0, %v579
    %v581 = vtanh.pop %v574
    %v582 = vmul.f32 %v580, %v477
    %584 = vrot.lane.b32.xlu0 %v581, 64
    %v585 = vpop.permute.xlu0 %584
    %v587 = vmul.f32 %v580, %v585
    %589 = vrot.lane.b32.xlu0 %v587, 32
    %v590 = vpop.permute.xlu0 %589
    %v592 = vadd.f32 %v582, %v590
    %v593 = vtanh.pop %v592
    %595 = vrot.lane.b32.xlu0 %v593, 64
    %v596 = vpop.permute.xlu0 %595
    %v598 = vmul.f32 %v580, %v596
    %600 = vrot.lane.b32.xlu0 %v598, 32
    %v601 = vpop.permute.xlu0 %600
    %v602 = vsel %vm60, %v601, 0
    %604 = vmatprep.subr.mxu0 0.0
    %605 = vmatpush1.msra.mxu0 0.0
    %606 = vmatprep.subr.mxu0 0.0
    %607 = vmatpush1.msra.mxu0 0.0
    %608 = vmatprep.subr.mxu0 0.0
    %609 = vmatpush1.msra.mxu0 0.0
    %610 = vmatprep.subr.mxu0 0.0
    %611 = vmatpush1.msra.mxu0 0.0
    %612 = vmatprep.subr.mxu0 0.0
    %613 = vmatpush1.msra.mxu0 0.0
    %614 = vmatprep.subr.mxu0 0.0
    %615 = vmatpush1.msra.mxu0 0.0
    %616 = vmatprep.subr.mxu0 0.0
    %617 = vmatpush1.msra.mxu0 0.0
    %618 = vmatprep.subr.mxu0 0.0
    %619 = vmatpush1.msra.mxu0 0.0
    %620 = vmatprep.subr.mxu0 0.0
    %621 = vmatpush1.msra.mxu0 0.0
    %622 = vmatprep.subr.mxu0 0.0
    %623 = vmatpush1.msra.mxu0 0.0
    %624 = vmatprep.subr.mxu0 0.0
    %625 = vmatpush1.msra.mxu0 0.0
    %626 = vmatprep.subr.mxu0 0.0
    %627 = vmatpush1.msra.mxu0 0.0
    %628 = vmatprep.subr.mxu0 %v151
    %629 = vmatpush1.msra.mxu0 %v150
    %630 = vmatprep.subr.mxu0 %v149
    %631 = vmatpush1.msra.mxu0 %v148
    %632 = vmatprep.subr.mxu0 %v147
    %633 = vmatpush1.msra.mxu0 %v146
    %634 = vmatprep.subr.mxu0 %v145
    %635 = vmatpush1.msra.mxu0 %v144
    %636 = vmatprep.subr.mxu0 0.0
    %637 = vmatpush2.msra.mxu0 0.0
    %638 = vmatprep.subr.mxu0 0.0
    %639 = vmatpush2.msra.mxu0 0.0
    %640 = vmatprep.subr.mxu0 0.0
    %641 = vmatpush2.msra.mxu0 0.0
    %642 = vmatprep.subr.mxu0 0.0
    %643 = vmatpush2.msra.mxu0 0.0
    %644 = vmatprep.subr.mxu0 0.0
    %645 = vmatpush2.msra.mxu0 0.0
    %646 = vmatprep.subr.mxu0 0.0
    %647 = vmatpush2.msra.mxu0 0.0
    %648 = vmatprep.subr.mxu0 0.0
    %649 = vmatpush2.msra.mxu0 0.0
    %650 = vmatprep.subr.mxu0 0.0
    %651 = vmatpush2.msra.mxu0 0.0
    %652 = vmatprep.subr.mxu0 0.0
    %653 = vmatpush2.msra.mxu0 0.0
    %654 = vmatprep.subr.mxu0 0.0
    %655 = vmatpush2.msra.mxu0 0.0
    %656 = vmatprep.subr.mxu0 0.0
    %657 = vmatpush2.msra.mxu0 0.0
    %658 = vmatprep.subr.mxu0 0.0
    %659 = vmatpush2.msra.mxu0 0.0
    %660 = vmatprep.subr.mxu0 0.0
    %661 = vmatpush2.msra.mxu0 0.0
    %662 = vmatprep.subr.mxu0 0.0
    %663 = vmatpush2.msra.mxu0 0.0
    %664 = vmatprep.subr.mxu0 0.0
    %665 = vmatpush2.msra.mxu0 0.0
    %666 = vmatprep.subr.mxu0 0.0
    %667 = vmatpush2.msra.mxu0 0.0
    %668 = vmatprep.mubr.f32.mxu0 0.0
    %669 = vmatmul.mubr.f32.gmra.mxu0 %v602
    %v670 = vpop.f32.mrf.mxu0
    %v671 = vadd.f32 0.0, %v670
    %v672 = vpop.f32.mrf.mxu0
    %v673 = vadd.f32 0.0, %v672
    %674 = vdwg.mxu0
    %v675 = vadd.f32 %v140, %v671
    %v677 = vrot.slane %v673, 4
    %v679 = vadd.f32 %v136, %v677
    %v681 = vrot.slane %v679, 4
    %v683 = vsel %vm234, %v675, %v681
    %v684 = vxor.u32 %v683, 2147483648
    %v685 = vmul.f32 %v684, 1.442695
    %v686 = vpow.pop %v685
    %v687 = vadd.f32 %v686, 1.0
    %v688 = vrcp.pop %v687
    %v689 = vmul.f32 1.0, %v688
    %v690 = vtanh.pop %v683
    %v691 = vmul.f32 %v689, %v592
    %693 = vrot.lane.b32.xlu0 %v690, 64
    %v694 = vpop.permute.xlu0 %693
    %v696 = vmul.f32 %v689, %v694
    %698 = vrot.lane.b32.xlu0 %v696, 32
    %v699 = vpop.permute.xlu0 %698
    %v701 = vadd.f32 %v691, %v699
    %v702 = vtanh.pop %v701
    %704 = vrot.lane.b32.xlu0 %v702, 64
    %v705 = vpop.permute.xlu0 %704
    %v707 = vmul.f32 %v689, %v705
    %709 = vrot.lane.b32.xlu0 %v707, 32
    %v710 = vpop.permute.xlu0 %709
    %v711 = vsel %vm60, %v710, 0
    %713 = vmatprep.subr.mxu0 0.0
    %714 = vmatpush1.msra.mxu0 0.0
    %715 = vmatprep.subr.mxu0 0.0
    %716 = vmatpush1.msra.mxu0 0.0
    %717 = vmatprep.subr.mxu0 0.0
    %718 = vmatpush1.msra.mxu0 0.0
    %719 = vmatprep.subr.mxu0 0.0
    %720 = vmatpush1.msra.mxu0 0.0
    %721 = vmatprep.subr.mxu0 0.0
    %722 = vmatpush1.msra.mxu0 0.0
    %723 = vmatprep.subr.mxu0 0.0
    %724 = vmatpush1.msra.mxu0 0.0
    %725 = vmatprep.subr.mxu0 0.0
    %726 = vmatpush1.msra.mxu0 0.0
    %727 = vmatprep.subr.mxu0 0.0
    %728 = vmatpush1.msra.mxu0 0.0
    %729 = vmatprep.subr.mxu0 0.0
    %730 = vmatpush1.msra.mxu0 0.0
    %731 = vmatprep.subr.mxu0 0.0
    %732 = vmatpush1.msra.mxu0 0.0
    %733 = vmatprep.subr.mxu0 0.0
    %734 = vmatpush1.msra.mxu0 0.0
    %735 = vmatprep.subr.mxu0 0.0
    %736 = vmatpush1.msra.mxu0 0.0
    %737 = vmatprep.subr.mxu0 %v151
    %738 = vmatpush1.msra.mxu0 %v150
    %739 = vmatprep.subr.mxu0 %v149
    %740 = vmatpush1.msra.mxu0 %v148
    %741 = vmatprep.subr.mxu0 %v147
    %742 = vmatpush1.msra.mxu0 %v146
    %743 = vmatprep.subr.mxu0 %v145
    %744 = vmatpush1.msra.mxu0 %v144
    %745 = vmatprep.subr.mxu0 0.0
    %746 = vmatpush2.msra.mxu0 0.0
    %747 = vmatprep.subr.mxu0 0.0
    %748 = vmatpush2.msra.mxu0 0.0
    %749 = vmatprep.subr.mxu0 0.0
    %750 = vmatpush2.msra.mxu0 0.0
    %751 = vmatprep.subr.mxu0 0.0
    %752 = vmatpush2.msra.mxu0 0.0
    %753 = vmatprep.subr.mxu0 0.0
    %754 = vmatpush2.msra.mxu0 0.0
    %755 = vmatprep.subr.mxu0 0.0
    %756 = vmatpush2.msra.mxu0 0.0
    %757 = vmatprep.subr.mxu0 0.0
    %758 = vmatpush2.msra.mxu0 0.0
    %759 = vmatprep.subr.mxu0 0.0
    %760 = vmatpush2.msra.mxu0 0.0
    %761 = vmatprep.subr.mxu0 0.0
    %762 = vmatpush2.msra.mxu0 0.0
    %763 = vmatprep.subr.mxu0 0.0
    %764 = vmatpush2.msra.mxu0 0.0
    %765 = vmatprep.subr.mxu0 0.0
    %766 = vmatpush2.msra.mxu0 0.0
    %767 = vmatprep.subr.mxu0 0.0
    %768 = vmatpush2.msra.mxu0 0.0
    %769 = vmatprep.subr.mxu0 0.0
    %770 = vmatpush2.msra.mxu0 0.0
    %771 = vmatprep.subr.mxu0 0.0
    %772 = vmatpush2.msra.mxu0 0.0
    %773 = vmatprep.subr.mxu0 0.0
    %774 = vmatpush2.msra.mxu0 0.0
    %775 = vmatprep.subr.mxu0 0.0
    %776 = vmatpush2.msra.mxu0 0.0
    %777 = vmatprep.mubr.f32.mxu0 0.0
    %778 = vmatmul.mubr.f32.gmra.mxu0 %v711
    %v779 = vpop.f32.mrf.mxu0
    %v780 = vadd.f32 0.0, %v779
    %v781 = vpop.f32.mrf.mxu0
    %v782 = vadd.f32 0.0, %v781
    %783 = vdwg.mxu0
    %v785 = vrot.slane %v780, 6
    %v787 = vadd.f32 %v140, %v785
    %v789 = vrot.slane %v782, 6
    %v791 = vadd.f32 %v136, %v789
    %v793 = vrot.slane %v787, 2
    %v796 = vrot.slane %v791, 2
    %v798 = vsel %vm234, %v793, %v796
    %v799 = vxor.u32 %v798, 2147483648
    %v800 = vmul.f32 %v799, 1.442695
    %v801 = vpow.pop %v800
    %v802 = vadd.f32 %v801, 1.0
    %v803 = vrcp.pop %v802
    %v804 = vmul.f32 1.0, %v803
    %v805 = vtanh.pop %v798
    %v806 = vmul.f32 %v804, %v701
    %808 = vrot.lane.b32.xlu0 %v805, 64
    %v809 = vpop.permute.xlu0 %808
    %v811 = vmul.f32 %v804, %v809
    %813 = vrot.lane.b32.xlu0 %v811, 32
    %v814 = vpop.permute.xlu0 %813
    %v816 = vadd.f32 %v806, %v814
    %v817 = vtanh.pop %v816
    %819 = vrot.lane.b32.xlu0 %v817, 64
    %v820 = vpop.permute.xlu0 %819
    %v822 = vmul.f32 %v804, %v820
    %824 = vrot.lane.b32.xlu0 %v822, 32
    %v825 = vpop.permute.xlu0 %824
    %v826 = vsel %vm60, %v825, 0
    %828 = vmatprep.subr.mxu0 0.0
    %829 = vmatpush1.msra.mxu0 0.0
    %830 = vmatprep.subr.mxu0 0.0
    %831 = vmatpush1.msra.mxu0 0.0
    %832 = vmatprep.subr.mxu0 0.0
    %833 = vmatpush1.msra.mxu0 0.0
    %834 = vmatprep.subr.mxu0 0.0
    %835 = vmatpush1.msra.mxu0 0.0
    %836 = vmatprep.subr.mxu0 0.0
    %837 = vmatpush1.msra.mxu0 0.0
    %838 = vmatprep.subr.mxu0 0.0
    %839 = vmatpush1.msra.mxu0 0.0
    %840 = vmatprep.subr.mxu0 0.0
    %841 = vmatpush1.msra.mxu0 0.0
    %842 = vmatprep.subr.mxu0 0.0
    %843 = vmatpush1.msra.mxu0 0.0
    %844 = vmatprep.subr.mxu0 0.0
    %845 = vmatpush1.msra.mxu0 0.0
    %846 = vmatprep.subr.mxu0 0.0
    %847 = vmatpush1.msra.mxu0 0.0
    %848 = vmatprep.subr.mxu0 0.0
    %849 = vmatpush1.msra.mxu0 0.0
    %850 = vmatprep.subr.mxu0 0.0
    %851 = vmatpush1.msra.mxu0 0.0
    %852 = vmatprep.subr.mxu0 %v151
    %853 = vmatpush1.msra.mxu0 %v150
    %854 = vmatprep.subr.mxu0 %v149
    %855 = vmatpush1.msra.mxu0 %v148
    %856 = vmatprep.subr.mxu0 %v147
    %857 = vmatpush1.msra.mxu0 %v146
    %858 = vmatprep.subr.mxu0 %v145
    %859 = vmatpush1.msra.mxu0 %v144
    %860 = vmatprep.subr.mxu0 0.0
    %861 = vmatpush2.msra.mxu0 0.0
    %862 = vmatprep.subr.mxu0 0.0
    %863 = vmatpush2.msra.mxu0 0.0
    %864 = vmatprep.subr.mxu0 0.0
    %865 = vmatpush2.msra.mxu0 0.0
    %866 = vmatprep.subr.mxu0 0.0
    %867 = vmatpush2.msra.mxu0 0.0
    %868 = vmatprep.subr.mxu0 0.0
    %869 = vmatpush2.msra.mxu0 0.0
    %870 = vmatprep.subr.mxu0 0.0
    %871 = vmatpush2.msra.mxu0 0.0
    %872 = vmatprep.subr.mxu0 0.0
    %873 = vmatpush2.msra.mxu0 0.0
    %874 = vmatprep.subr.mxu0 0.0
    %875 = vmatpush2.msra.mxu0 0.0
    %876 = vmatprep.subr.mxu0 0.0
    %877 = vmatpush2.msra.mxu0 0.0
    %878 = vmatprep.subr.mxu0 0.0
    %879 = vmatpush2.msra.mxu0 0.0
    %880 = vmatprep.subr.mxu0 0.0
    %881 = vmatpush2.msra.mxu0 0.0
    %882 = vmatprep.subr.mxu0 0.0
    %883 = vmatpush2.msra.mxu0 0.0
    %884 = vmatprep.subr.mxu0 0.0
    %885 = vmatpush2.msra.mxu0 0.0
    %886 = vmatprep.subr.mxu0 0.0
    %887 = vmatpush2.msra.mxu0 0.0
    %888 = vmatprep.subr.mxu0 0.0
    %889 = vmatpush2.msra.mxu0 0.0
    %890 = vmatprep.subr.mxu0 0.0
    %891 = vmatpush2.msra.mxu0 0.0
    %892 = vmatprep.mubr.f32.mxu0 0.0
    %893 = vmatmul.mubr.f32.gmra.mxu0 %v826
    %v894 = vpop.f32.mrf.mxu0
    %v895 = vadd.f32 0.0, %v894
    %v896 = vpop.f32.mrf.mxu0
    %v897 = vadd.f32 0.0, %v896
    %898 = vdwg.mxu0
    %v900 = vrot.slane %v895, 4
    %v902 = vadd.f32 %v140, %v900
    %v903 = vadd.f32 %v136, %v897
    %v905 = vrot.slane %v902, 4
    %v907 = vsel %vm234, %v905, %v903
    %v908 = vxor.u32 %v907, 2147483648
    %v909 = vmul.f32 %v908, 1.442695
    %v910 = vpow.pop %v909
    %v911 = vadd.f32 %v910, 1.0
    %v912 = vrcp.pop %v911
    %v913 = vmul.f32 1.0, %v912
    %v914 = vtanh.pop %v907
    %v915 = vmul.f32 %v913, %v816
    %917 = vrot.lane.b32.xlu0 %v914, 64
    %v918 = vpop.permute.xlu0 %917
    %v920 = vmul.f32 %v913, %v918
    %922 = vrot.lane.b32.xlu0 %v920, 32
    %v923 = vpop.permute.xlu0 %922
    %v925 = vadd.f32 %v915, %v923
    %v926 = vtanh.pop %v925
    %928 = vrot.lane.b32.xlu0 %v926, 64
    %v929 = vpop.permute.xlu0 %928
    %v931 = vmul.f32 %v913, %v929
    %933 = vrot.lane.b32.xlu0 %v931, 32
    %v934 = vpop.permute.xlu0 %933
    %v935 = vsel %vm60, %v934, 0
    %937 = vmatprep.subr.mxu0 0.0
    %938 = vmatpush1.msra.mxu0 0.0
    %939 = vmatprep.subr.mxu0 0.0
    %940 = vmatpush1.msra.mxu0 0.0
    %941 = vmatprep.subr.mxu0 0.0
    %942 = vmatpush1.msra.mxu0 0.0
    %943 = vmatprep.subr.mxu0 0.0
    %944 = vmatpush1.msra.mxu0 0.0
    %945 = vmatprep.subr.mxu0 0.0
    %946 = vmatpush1.msra.mxu0 0.0
    %947 = vmatprep.subr.mxu0 0.0
    %948 = vmatpush1.msra.mxu0 0.0
    %949 = vmatprep.subr.mxu0 0.0
    %950 = vmatpush1.msra.mxu0 0.0
    %951 = vmatprep.subr.mxu0 0.0
    %952 = vmatpush1.msra.mxu0 0.0
    %953 = vmatprep.subr.mxu0 0.0
    %954 = vmatpush1.msra.mxu0 0.0
    %955 = vmatprep.subr.mxu0 0.0
    %956 = vmatpush1.msra.mxu0 0.0
    %957 = vmatprep.subr.mxu0 0.0
    %958 = vmatpush1.msra.mxu0 0.0
    %959 = vmatprep.subr.mxu0 0.0
    %960 = vmatpush1.msra.mxu0 0.0
    %961 = vmatprep.subr.mxu0 %v151
    %962 = vmatpush1.msra.mxu0 %v150
    %963 = vmatprep.subr.mxu0 %v149
    %964 = vmatpush1.msra.mxu0 %v148
    %965 = vmatprep.subr.mxu0 %v147
    %966 = vmatpush1.msra.mxu0 %v146
    %967 = vmatprep.subr.mxu0 %v145
    %968 = vmatpush1.msra.mxu0 %v144
    %969 = vmatprep.subr.mxu0 0.0
    %970 = vmatpush2.msra.mxu0 0.0
    %971 = vmatprep.subr.mxu0 0.0
    %972 = vmatpush2.msra.mxu0 0.0
    %973 = vmatprep.subr.mxu0 0.0
    %974 = vmatpush2.msra.mxu0 0.0
    %975 = vmatprep.subr.mxu0 0.0
    %976 = vmatpush2.msra.mxu0 0.0
    %977 = vmatprep.subr.mxu0 0.0
    %978 = vmatpush2.msra.mxu0 0.0
    %979 = vmatprep.subr.mxu0 0.0
    %980 = vmatpush2.msra.mxu0 0.0
    %981 = vmatprep.subr.mxu0 0.0
    %982 = vmatpush2.msra.mxu0 0.0
    %983 = vmatprep.subr.mxu0 0.0
    %984 = vmatpush2.msra.mxu0 0.0
    %985 = vmatprep.subr.mxu0 0.0
    %986 = vmatpush2.msra.mxu0 0.0
    %987 = vmatprep.subr.mxu0 0.0
    %988 = vmatpush2.msra.mxu0 0.0
    %989 = vmatprep.subr.mxu0 0.0
    %990 = vmatpush2.msra.mxu0 0.0
    %991 = vmatprep.subr.mxu0 0.0
    %992 = vmatpush2.msra.mxu0 0.0
    %993 = vmatprep.subr.mxu0 0.0
    %994 = vmatpush2.msra.mxu0 0.0
    %995 = vmatprep.subr.mxu0 0.0
    %996 = vmatpush2.msra.mxu0 0.0
    %997 = vmatprep.subr.mxu0 0.0
    %998 = vmatpush2.msra.mxu0 0.0
    %999 = vmatprep.subr.mxu0 0.0
    %1000 = vmatpush2.msra.mxu0 0.0
    %1001 = vmatprep.mubr.f32.mxu0 0.0
    %1002 = vmatmul.mubr.f32.gmra.mxu0 %v935
    %v1003 = vpop.f32.mrf.mxu0
    %v1004 = vadd.f32 0.0, %v1003
    %v1005 = vpop.f32.mrf.mxu0
    %v1006 = vadd.f32 0.0, %v1005
    %1007 = vdwg.mxu0
    %v1009 = vrot.slane %v1004, 2
    %v1011 = vadd.f32 %v140, %v1009
    %v1013 = vrot.slane %v1006, 2
    %v1015 = vadd.f32 %v136, %v1013
    %v1017 = vrot.slane %v1011, 6
    %v1020 = vrot.slane %v1015, 6
    %v1022 = vsel %vm234, %v1017, %v1020
    %v1023 = vxor.u32 %v1022, 2147483648
    %v1024 = vmul.f32 %v1023, 1.442695
    %v1025 = vpow.pop %v1024
    %v1026 = vadd.f32 %v1025, 1.0
    %v1027 = vrcp.pop %v1026
    %v1028 = vmul.f32 1.0, %v1027
    %v1029 = vtanh.pop %v1022
    %v1030 = vmul.f32 %v1028, %v925
    %1032 = vrot.lane.b32.xlu0 %v1029, 64
    %v1033 = vpop.permute.xlu0 %1032
    %v1035 = vmul.f32 %v1028, %v1033
    %1037 = vrot.lane.b32.xlu0 %v1035, 32
    %v1038 = vpop.permute.xlu0 %1037
    %v1040 = vadd.f32 %v1030, %v1038
    %v1041 = vtanh.pop %v1040
    %1043 = vrot.lane.b32.xlu0 %v1041, 64
    %v1044 = vpop.permute.xlu0 %1043
    %v1046 = vmul.f32 %v1028, %v1044
    %v1047 = vrot.slane %v374, 6
    %v1049 = vrot.slane %v483, 4
    %v1051 = vrot.slane %v598, 2
    %v1053 = vrot.slane %v822, 6
    %v1055 = vrot.slane %v931, 4
    %v1058 = vrot.slane %v1046, 2
    %v1060 = vsel %vm234, %v259, %v1047
    %vm1061 = vcmask 1043456
    %v1062 = vsel %vm1061, %v1060, %v1049
    %vm1063 = vcmask 1045504
    %v1064 = vsel %vm1063, %v1062, %v1051
    %v1065 = vsel %vm234, %v707, %v1053
    %v1066 = vsel %vm1061, %v1065, %v1055
    %v1067 = vsel %vm1063, %v1066, %v1058
    %v1068 = vrot.slane %v707, 4
    %v1070 = vrot.slane %v259, 4
    %v1072 = vsel %vm234, %v1058, %v931
    %v1073 = vsel %vm1061, %v1072, %v1053
    %v1074 = vsel %vm1063, %v1073, %v1068
    %v1075 = vsel %vm234, %v1051, %v483
    %v1076 = vsel %vm1061, %v1075, %v1047
    %v1077 = vsel %vm1063, %v1076, %v1070
    %1080 = vrot.lane.b32.xlu0 %v1064, 32
    %v1081 = vpop.permute.xlu0 %1080
    %1082 = vrot.lane.b32.xlu0 %v1067, 32
    %v1083 = vpop.permute.xlu0 %1082
    %1088 = vrot.lane.b32.xlu0 %v1074, 64
    %v1089 = vpop.permute.xlu0 %1088
    %1090 = vrot.lane.b32.xlu0 %v1077, 64
    %v1091 = vpop.permute.xlu0 %1090
    %v1094 = vsel %vm60, %v1081, %v1089
    %v1095 = vsel %vm60, %v1083, %v1091
    %v1096 = vld [vmem:[%s4] sm:$0xff]
    %v1097 = vld [vmem:[%s4 + $0x8] sm:$0xff]
    %v1098 = vld [vmem:[%s4 + $0x10] sm:$0xff]
    %v1099 = vld [vmem:[%s4 + $0x18] sm:$0xff]
    %v1100 = vld [vmem:[%s4 + $0x20] sm:$0xff]
    %v1101 = vld [vmem:[%s4 + $0x28] sm:$0xff]
    %v1102 = vld [vmem:[%s4 + $0x30] sm:$0xff]
    %v1103 = vld [vmem:[%s4 + $0x38] sm:$0xff]
    %v1104 = vld [vmem:[%s5] sm:$0x1]
    %v1106 = vlaneseq
    %v1107 = vshrl.u32 %v1106, 7
    %v1108 = vsub.s32 0, %v1107
    %v1109 = vrot.slane %v1104, %v1108
    %vm1111 = vcmask 523264
    %v1113 = vsel %vm1111, %v1094, 0
    %v1116 = vsel %vm1111, %v1095, 0
    %1118 = vmatprep.subr.mxu0 0.0
    %1119 = vmatpush1.msra.mxu0 0.0
    %1120 = vmatprep.subr.mxu0 0.0
    %1121 = vmatpush1.msra.mxu0 0.0
    %1122 = vmatprep.subr.mxu0 0.0
    %1123 = vmatpush1.msra.mxu0 0.0
    %1124 = vmatprep.subr.mxu0 0.0
    %1125 = vmatpush1.msra.mxu0 0.0
    %1126 = vmatprep.subr.mxu0 0.0
    %1127 = vmatpush1.msra.mxu0 0.0
    %1128 = vmatprep.subr.mxu0 0.0
    %1129 = vmatpush1.msra.mxu0 0.0
    %1130 = vmatprep.subr.mxu0 0.0
    %1131 = vmatpush1.msra.mxu0 0.0
    %1132 = vmatprep.subr.mxu0 0.0
    %1133 = vmatpush1.msra.mxu0 0.0
    %1134 = vmatprep.subr.mxu0 0.0
    %1135 = vmatpush1.msra.mxu0 %v1103
    %1136 = vmatprep.subr.mxu0 0.0
    %1137 = vmatpush1.msra.mxu0 %v1102
    %1138 = vmatprep.subr.mxu0 0.0
    %1139 = vmatpush1.msra.mxu0 %v1101
    %1140 = vmatprep.subr.mxu0 0.0
    %1141 = vmatpush1.msra.mxu0 %v1100
    %1142 = vmatprep.subr.mxu0 0.0
    %1143 = vmatpush1.msra.mxu0 %v1099
    %1144 = vmatprep.subr.mxu0 0.0
    %1145 = vmatpush1.msra.mxu0 %v1098
    %1146 = vmatprep.subr.mxu0 0.0
    %1147 = vmatpush1.msra.mxu0 %v1097
    %1148 = vmatprep.subr.mxu0 0.0
    %1149 = vmatpush1.msra.mxu0 %v1096
    %1150 = vmatprep.subr.mxu0 0.0
    %1151 = vmatpush2.msra.mxu0 0.0
    %1152 = vmatprep.subr.mxu0 0.0
    %1153 = vmatpush2.msra.mxu0 0.0
    %1154 = vmatprep.subr.mxu0 0.0
    %1155 = vmatpush2.msra.mxu0 0.0
    %1156 = vmatprep.subr.mxu0 0.0
    %1157 = vmatpush2.msra.mxu0 0.0
    %1158 = vmatprep.subr.mxu0 0.0
    %1159 = vmatpush2.msra.mxu0 0.0
    %1160 = vmatprep.subr.mxu0 0.0
    %1161 = vmatpush2.msra.mxu0 0.0
    %1162 = vmatprep.subr.mxu0 0.0
    %1163 = vmatpush2.msra.mxu0 0.0
    %1164 = vmatprep.subr.mxu0 0.0
    %1165 = vmatpush2.msra.mxu0 0.0
    %1166 = vmatprep.subr.mxu0 0.0
    %1167 = vmatpush2.msra.mxu0 0.0
    %1168 = vmatprep.subr.mxu0 0.0
    %1169 = vmatpush2.msra.mxu0 0.0
    %1170 = vmatprep.subr.mxu0 0.0
    %1171 = vmatpush2.msra.mxu0 0.0
    %1172 = vmatprep.subr.mxu0 0.0
    %1173 = vmatpush2.msra.mxu0 0.0
    %1174 = vmatprep.subr.mxu0 0.0
    %1175 = vmatpush2.msra.mxu0 0.0
    %1176 = vmatprep.subr.mxu0 0.0
    %1177 = vmatpush2.msra.mxu0 0.0
    %1178 = vmatprep.subr.mxu0 0.0
    %1179 = vmatpush2.msra.mxu0 0.0
    %1180 = vmatprep.subr.mxu0 0.0
    %1181 = vmatpush2.msra.mxu0 0.0
    %1182 = vmatprep.mubr.f32.mxu0 0.0
    %1183 = vmatmul.mubr.f32.gmra.mxu0 %v1113
    %v1184 = vpop.f32.mrf.mxu0
    %v1185 = vadd.f32 %v1109, %v1184
    %v1186 = vpop.f32.mrf.mxu0
    %1187 = vmatprep.mubr.f32.mxu0 0.0
    %1188 = vmatmul.mubr.f32.gmra.mxu0 %v1116
    %v1189 = vpop.f32.mrf.mxu0
    %v1190 = vadd.f32 %v1109, %v1189
    %v1191 = vpop.f32.mrf.mxu0
    %1192 = vdwg.mxu0
    %vm1193 = vcmask 130048
    %v1194 = vsel %vm1193, %v1185, -inf
    %1195 = vmax.xlane.f32.xlu0 %v1194
    %v1196 = vpop.xlane.xlu0 %1195
    %v1197 = vsel %vm1193, %v1190, -inf
    %1198 = vmax.xlane.f32.xlu0 %v1197
    %v1199 = vpop.xlane.xlu0 %1198
    %v1200 = vsub.f32 %v1185, %v1196
    %v1201 = vsub.f32 %v1190, %v1199
    %v1202 = vmul.f32 %v1200, 1.442695
    %v1203 = vpow.pop %v1202
    %v1204 = vmul.f32 %v1201, 1.442695
    %v1205 = vpow.pop %v1204
    %v1206 = vsel %vm1193, %v1203, 0.0
    %1207 = vadd.xlane.f32.xlu0 %v1206
    %v1208 = vpop.xlane.xlu0 %1207
    %v1209 = vsel %vm1193, %v1205, 0.0
    %1210 = vadd.xlane.f32.xlu0 %v1209
    %v1211 = vpop.xlane.xlu0 %1210
    %v1212 = vlog2.pop %v1208
    %v1213 = vmul.f32 %v1212, 0.6931472
    %v1214 = vlog2.pop %v1211
    %v1215 = vmul.f32 %v1214, 0.6931472
    %v1216 = vsub.f32 %v1200, %v1213
    %v1217 = vsub.f32 %v1201, %v1215
    %1218 = vst.msk [vmem:[#allocation5] sm:$0xff] %vm1193, %v1216
    %1219 = vst.msk [vmem:[#allocation5 + $0x8] sm:$0xff] %vm1193, %v1217
    // Predicated region
    $region30: #{tpu_custom_call.1} parent=1 // pred_check
      _
    $region31: #{tpu_custom_call.1} parent=1 // pred_check_branch
      %1221 = sbr.rel (0) target = $region33
    $region32: #{tpu_custom_call.1} parent=1 // pred_region
      %s1223 = ssub.s32 256, 256
      %1224 = vsyncadd [#allocation4], %s1223
      %s1225 = sshll.u32 [#allocation5], 4
      %s1226 = int_to_ptr.vmem [resolvable:$true] %s1225
      %1231 = dma.vmem_to_hbm [thread:$0]  %s1226, 256, %s6, [#allocation4], 128, 128, 8
    $region33: #{tpu_custom_call.1} parent=1 // pred_fallthru
      _
    // Predicated region
    $region34: #{tpu_custom_call.1} parent=1 // pred_check
      _
    $region35: #{tpu_custom_call.1} parent=1 // pred_check_branch
      %1233 = sbr.rel (0) target = $region37
    $region36: #{tpu_custom_call.1} parent=1 // pred_region
      %1234 = dma.done [#allocation4], 256
    $region37: #{tpu_custom_call.1} parent=1 // pred_fallthru
      _
    %1235 = vsyncpa [#allocation3], 1
    %1236 = vsyncpa [#allocation4], 1

</llo_original>
